<compile_context>
chip_gen: v7x
topology: tpu7x:2x2x1
jax: 0.10.0
libtpu: 0.0.40
codegen_flags: <defaults>
</compile_context>

<pallas_src>
import functools

import jax
import jax.numpy as jnp
from jax.experimental import pallas as pl
from jax.experimental.pallas import tpu as pltpu


_SUBLANE = 8     # f32 sublane multiple
_LANE = 128      # lane multiple


def _round_up(x, m):
    return (x + m - 1) // m * m


# ----------------------------------------------------------------------------
# Pallas kernel: the serial LSTM recurrence only.
#   inputs : gates_x block (Tb, Bp, 4Hp)  -- precomputed x@W_ih^T + b
#            lengths       (Bp, 1)        -- grid-invariant
#            W_hh^T        (Hp, 4Hp)      -- grid-invariant
#   outputs: per-step hidden (Tb, Bp, Hp), final h/c (1, Bp, Hp),
#            sentemb = running max over valid timesteps (Bp, Hp)
# ----------------------------------------------------------------------------
def lstm_recurrence_kernel(gx_ref, len_ref, whh_ref,
                           out_ref, hN_ref, cN_ref, sent_ref,
                           h_sc, c_sc, m_sc):
    s = pl.program_id(0)
    S = pl.num_programs(0)
    Tb = gx_ref.shape[0]
    Hp = h_sc.shape[-1]

    @pl.when(s == 0)
    def _():
        h_sc[...] = jnp.zeros_like(h_sc)              # h0 = 0
        c_sc[...] = jnp.zeros_like(c_sc)              # c0 = 0
        m_sc[...] = jnp.full_like(m_sc, -jnp.inf)     # running max over time

    lens = len_ref[...]                               # (Bp, 1), resident
    whh = whh_ref[...]                                # (Hp, 4Hp), resident
    t0 = s * Tb

    def step(i, carry):
        h, c, m = carry
        gates = gx_ref[i] + jnp.dot(h.astype(whh.dtype), whh,
                                    preferred_element_type=jnp.float32)
        # lane-aligned gate splits (Hp is a multiple of 128)
        i_g = jax.nn.sigmoid(gates[:, 0:Hp])
        f_g = jax.nn.sigmoid(gates[:, Hp:2 * Hp])
        g_g = jnp.tanh(gates[:, 2 * Hp:3 * Hp])
        o_g = jax.nn.sigmoid(gates[:, 3 * Hp:4 * Hp])
        c_new = f_g * c + i_g * g_g
        h_new = o_g * jnp.tanh(c_new)

        # packed-sequence semantics: once t >= length, h/c freeze and the
        # emitted output is -inf (padding_value then masked_fill(-inf)).
        valid = (t0 + i) < lens                       # (Bp, 1) bool
        h = jnp.where(valid, h_new, h)
        c = jnp.where(valid, c_new, c)
        out_ref[i] = jnp.where(valid, h_new, -jnp.inf)
        m = jnp.where(valid, jnp.maximum(m, h_new), m)
        return h, c, m

    h, c, m = jax.lax.fori_loop(0, Tb, step,
                                (h_sc[...], c_sc[...], m_sc[...]),
                                unroll=True)
    h_sc[...] = h
    c_sc[...] = c
    m_sc[...] = m

    @pl.when(s == S - 1)
    def _():
        hN_ref[0] = h_sc[...]                         # final_hiddens (1 layer)
        cN_ref[0] = c_sc[...]                         # final_cells
        sent_ref[...] = m_sc[...]                     # sentemb


# ----------------------------------------------------------------------------
# Weight padding helpers (per-gate column padding keeps PyTorch gate order).
# ----------------------------------------------------------------------------
def _pad_gate_cols(w_t, H, Hp):
    # w_t: (in, 4H) with gate blocks [i|f|g|o]; pad each block's cols to Hp.
    if H == Hp:
        return w_t
    n_in = w_t.shape[0]
    w4 = w_t.reshape(n_in, 4, H)
    w4 = jnp.pad(w4, ((0, 0), (0, 0), (0, Hp - H)))
    return w4.reshape(n_in, 4 * Hp)


# ----------------------------------------------------------------------------
# Jitted core: embedding, hoisted input GEMM, Pallas recurrence.
# ----------------------------------------------------------------------------
@functools.partial(jax.jit, static_argnames=("padding_idx", "left_pad",
                                             "time_block", "matmul_dtype"))
def _encoder_core(src_tokens, src_lengths, params, *, padding_idx, left_pad,
                  time_block, matmul_dtype):
    bsz, seqlen = src_tokens.shape
    mdtype = jnp.dtype(matmul_dtype)

    # convert_padding_direction(left_to_right=True)
    pad_mask = src_tokens == padding_idx
    if left_pad:
        rng = jnp.arange(seqlen, dtype=src_tokens.dtype)[None, :]
        num_pads = pad_mask.astype(src_tokens.dtype).sum(axis=1, keepdims=True)
        index = jnp.remainder(rng + num_pads, seqlen)
        shifted = jnp.take_along_axis(src_tokens, index, axis=1)
        do_shift = pad_mask[:, 0].any()               # early-return conditions
        src_tokens = jnp.where(do_shift, shifted, src_tokens)
    pad_mask = src_tokens == padding_idx              # converted-token pads

    H = params["w_hh_t"].shape[0]
    Hp = _round_up(H, _LANE)
    Bp = _round_up(bsz, _SUBLANE)
    Tb = max(1, min(time_block, seqlen))
    Tp = _round_up(seqlen, Tb)

    # --- embedding + hoisted input projection (one big parallel GEMM) -------
    emb = jnp.take(params["embed"], src_tokens, axis=0).astype(jnp.float32)
    w_ih_t = _pad_gate_cols(params["w_ih_t"].astype(jnp.float32), H, Hp)
    bias = _pad_gate_cols(params["bias"].reshape(1, -1).astype(jnp.float32),
                          H, Hp)
    # produce gates_x directly time-major; avoids materializing a transposed x
    gates_x = jnp.einsum("bte,eg->tbg", emb, w_ih_t,
                         preferred_element_type=jnp.float32) + bias
    gates_x = jnp.pad(gates_x, ((0, Tp - seqlen), (0, Bp - bsz), (0, 0)))

    w_hh_t = _pad_gate_cols(params["w_hh_t"].astype(jnp.float32), H, Hp)
    w_hh_t = jnp.pad(w_hh_t, ((0, Hp - H), (0, 0))).astype(mdtype)  # (Hp, 4Hp)

    lens = jnp.pad(src_lengths.astype(jnp.int32), (0, Bp - bsz))
    lens = lens.reshape(Bp, 1)                        # padded rows: length 0

    out_shapes = (
        jax.ShapeDtypeStruct((Tp, Bp, Hp), jnp.float32),  # encoder_out x
        jax.ShapeDtypeStruct((1, Bp, Hp), jnp.float32),   # final_hiddens
        jax.ShapeDtypeStruct((1, Bp, Hp), jnp.float32),   # final_cells
        jax.ShapeDtypeStruct((Bp, Hp), jnp.float32),      # sentemb
    )
    grid_spec = pltpu.PrefetchScalarGridSpec(
        num_scalar_prefetch=0,
        grid=(Tp // Tb,),
        in_specs=[
            pl.BlockSpec((Tb, Bp, 4 * Hp), lambda s: (s, 0, 0)),  # gates_x
            pl.BlockSpec((Bp, 1), lambda s: (0, 0)),              # lengths
            pl.BlockSpec((Hp, 4 * Hp), lambda s: (0, 0)),         # W_hh^T
        ],
        out_specs=[
            pl.BlockSpec((Tb, Bp, Hp), lambda s: (s, 0, 0)),
            pl.BlockSpec((1, Bp, Hp), lambda s: (0, 0, 0)),
            pl.BlockSpec((1, Bp, Hp), lambda s: (0, 0, 0)),
            pl.BlockSpec((Bp, Hp), lambda s: (0, 0)),
        ],
        scratch_shapes=[pltpu.VMEM((Bp, Hp), jnp.float32),   # h
                        pltpu.VMEM((Bp, Hp), jnp.float32),   # c
                        pltpu.VMEM((Bp, Hp), jnp.float32)],  # running max
    )

    x_out, hN, cN, sentemb = pl.pallas_call(
        lstm_recurrence_kernel,
        grid_spec=grid_spec,
        out_shape=out_shapes,
        compiler_params=pltpu.CompilerParams(
            dimension_semantics=("arbitrary",)),      # sequential recurrence
    )(gates_x, lens, w_hh_t)

    x_out = x_out[:seqlen, :bsz, :H]
    hN = hN[:, :bsz, :H]
    cN = cN[:, :bsz, :H]
    sentemb = sentemb[:bsz, :H]
    return x_out, hN, cN, sentemb, pad_mask.T


def encoder_forward(src_tokens, src_lengths, params, *, padding_idx=0,
                    left_pad=True, time_block=8, matmul_dtype="float32"):
    x_out, hN, cN, sentemb, enc_pad_mask = _encoder_core(
        src_tokens, src_lengths, params, padding_idx=padding_idx,
        left_pad=left_pad, time_block=time_block, matmul_dtype=matmul_dtype)
    # None-conversion happens AFTER the jitted compute (single post-hoc host
    # read), matching the module's `if encoder_padding_mask.any()`.
    has_pad = bool(jax.device_get(enc_pad_mask.any()))
    return {
        "sentemb": sentemb,
        "encoder_out": (x_out, hN, cN),
        "encoder_padding_mask": enc_pad_mask if has_pad else None,
    }


# ----------------------------------------------------------------------------
# Deterministic parameter construction (shapes from Encoder.__init__).
# ----------------------------------------------------------------------------
def init_params(key, num_embeddings, embed_dim, hidden_size, padding_idx):
    k1, k2, k3, k4, k5 = jax.random.split(key, 5)
    embed = jax.random.normal(k1, (num_embeddings, embed_dim), jnp.float32) * 0.1
    embed = embed.at[padding_idx].set(0.0)
    w_ih = jax.random.normal(k2, (4 * hidden_size, embed_dim), jnp.float32) * 0.1
    w_hh = jax.random.normal(k3, (4 * hidden_size, hidden_size), jnp.float32) * 0.1
    b_ih = jax.random.normal(k4, (4 * hidden_size,), jnp.float32) * 0.1
    b_hh = jax.random.normal(k5, (4 * hidden_size,), jnp.float32) * 0.1
    return {
        "embed": embed,
        "w_ih_t": jnp.asarray(w_ih.T),                # (E, 4H)
        "w_hh_t": jnp.asarray(w_hh.T),                # (H, 4H)
        "bias": b_ih + b_hh,                          # (4H,)
    }


# ----------------------------------------------------------------------------
# Pure-JAX reference (lax.scan) for a correctness check.
# ----------------------------------------------------------------------------
def ref_forward(x, lens2d, params):
    T, B, E = x.shape
    H = params["w_hh_t"].shape[0]
    w_ih_t, w_hh_t, bias = params["w_ih_t"], params["w_hh_t"], params["bias"]

    def step(carry, inp):
        h, c = carry
        x_t, t = inp
        gates = x_t @ w_ih_t + h @ w_hh_t + bias
        i = jax.nn.sigmoid(gates[:, :H])
        f = jax.nn.sigmoid(gates[:, H:2 * H])
        g = jnp.tanh(gates[:, 2 * H:3 * H])
        o = jax.nn.sigmoid(gates[:, 3 * H:])
        c_new = f * c + i * g
        h_new = o * jnp.tanh(c_new)
        valid = t < lens2d
        h = jnp.where(valid, h_new, h)
        c = jnp.where(valid, c_new, c)
        out = jnp.where(valid, h_new, -jnp.inf)
        return (h, c), out

    h0 = jnp.zeros((B, H), jnp.float32)
    c0 = jnp.zeros((B, H), jnp.float32)
    (hN, cN), outs = jax.lax.scan(step, (h0, c0),
                                  (x, jnp.arange(T, dtype=jnp.int32)))
    sentemb = outs.max(axis=0)
    return outs, hN[None], cN[None], sentemb


if __name__ == "__main__":
    num_embeddings = 50
    padding_idx = 0
    embed_dim = 32
    hidden_size = 32
    bsz, seqlen = 2, 8

    key = jax.random.PRNGKey(0)
    kp, kt = jax.random.split(key)
    params = init_params(kp, num_embeddings, embed_dim, hidden_size, padding_idx)

    # left-padded tokens, lengths sorted descending (pack_padded_sequence req.)
    src_lengths = jnp.array([8, 5], dtype=jnp.int32)
    vals = jax.random.randint(kt, (bsz, seqlen), 1, num_embeddings, jnp.int32)
    pos = jnp.arange(seqlen)[None, :]
    left_pad_mask = pos < (seqlen - src_lengths[:, None])   # pads on the left
    src_tokens = jnp.where(left_pad_mask, padding_idx, vals)

    out = encoder_forward(src_tokens, src_lengths, params,
                          padding_idx=padding_idx, left_pad=True)
    jax.block_until_ready(out)

    # correctness check vs. pure-JAX reference
    pad_mask = src_tokens == padding_idx
    rng = jnp.arange(seqlen, dtype=src_tokens.dtype)[None, :]
    num_pads = pad_mask.astype(src_tokens.dtype).sum(axis=1, keepdims=True)
    conv_tokens = jnp.take_along_axis(
        src_tokens, jnp.remainder(rng + num_pads, seqlen), axis=1)
    emb = jnp.take(params["embed"], conv_tokens, axis=0)
    x_ref = jnp.transpose(emb, (1, 0, 2)).astype(jnp.float32)
    r_out, r_h, r_c, r_sent = ref_forward(
        x_ref, src_lengths.reshape(bsz, 1), params)

    x_out, hN, cN = out["encoder_out"]
    assert jnp.allclose(x_out, r_out, atol=2e-4, rtol=2e-4)
    assert jnp.allclose(hN, r_h, atol=2e-4, rtol=2e-4)
    assert jnp.allclose(cN, r_c, atol=2e-4, rtol=2e-4)
    assert jnp.allclose(out["sentemb"], r_sent, atol=2e-4, rtol=2e-4)
    assert out["encoder_padding_mask"].shape == (seqlen, bsz)

    print("KERNEL_OK")
</pallas_src>

<mosaic_0001>
module attributes {stable_mosaic.version = 11 : i64} {
  func.func @lstm_recurrence_kernel(%arg0: i32, %arg1: memref<8x8x512xf32, #tpu.memory_space<vmem>>, %arg2: memref<8x1xi32, #tpu.memory_space<vmem>>, %arg3: memref<128x512xf32, #tpu.memory_space<vmem>>, %arg4: memref<8x8x128xf32, #tpu.memory_space<vmem>>, %arg5: memref<1x8x128xf32, #tpu.memory_space<vmem>>, %arg6: memref<1x8x128xf32, #tpu.memory_space<vmem>>, %arg7: memref<8x128xf32, #tpu.memory_space<vmem>>, %arg8: memref<8x128xf32, #tpu.memory_space<vmem>>, %arg9: memref<8x128xf32, #tpu.memory_space<vmem>>, %arg10: memref<8x128xf32, #tpu.memory_space<vmem>>) attributes {dimension_semantics = [#tpu.dimension_semantics<arbitrary>], iteration_bounds = array<i64: 1>, scalar_prefetch = 0 : i64, scratch_operands = 3 : i64, tpu.core_type = #tpu.core_type<tc>, window_params = [{transform_indices = @transform_0, window_bounds = array<i64: 8, 8, 512>}, {pipeline_mode = #tpu.pipeline_mode<synchronous>, transform_indices = @transform_1, window_bounds = array<i64: 8, 1>}, {pipeline_mode = #tpu.pipeline_mode<synchronous>, transform_indices = @transform_2, window_bounds = array<i64: 128, 512>}, {transform_indices = @transform_3, window_bounds = array<i64: 8, 8, 128>}, {pipeline_mode = #tpu.pipeline_mode<synchronous>, transform_indices = @transform_4, window_bounds = array<i64: 1, 8, 128>}, {pipeline_mode = #tpu.pipeline_mode<synchronous>, transform_indices = @transform_5, window_bounds = array<i64: 1, 8, 128>}, {pipeline_mode = #tpu.pipeline_mode<synchronous>, transform_indices = @transform_6, window_bounds = array<i64: 8, 128>}]} {
    %c0_i32 = arith.constant 0 : i32
    %0 = arith.cmpi eq, %arg0, %c0_i32 : i32
    %1 = arith.extui %0 : i1 to i32
    %c0_i32_0 = arith.constant 0 : i32
    %2 = arith.cmpi ne, %1, %c0_i32_0 : i32
    scf.if %2 {
      %cst_91 = arith.constant 0.000000e+00 : f32
      %423 = vector.broadcast %cst_91 : f32 to vector<8x128xf32>
      %c0_92 = arith.constant 0 : index
      %c0_93 = arith.constant 0 : index
      %424 = vector.load %arg8[%c0_92, %c0_93] : memref<8x128xf32, #tpu.memory_space<vmem>>, vector<8x128xf32>
      tpu.vector_store %arg8[%c0_92, %c0_93], %423 {strides = array<i32>} : memref<8x128xf32, #tpu.memory_space<vmem>>, vector<8x128xf32>,
      %cst_94 = arith.constant 0.000000e+00 : f32
      %425 = vector.broadcast %cst_94 : f32 to vector<8x128xf32>
      %c0_95 = arith.constant 0 : index
      %c0_96 = arith.constant 0 : index
      %426 = vector.load %arg9[%c0_95, %c0_96] : memref<8x128xf32, #tpu.memory_space<vmem>>, vector<8x128xf32>
      tpu.vector_store %arg9[%c0_95, %c0_96], %425 {strides = array<i32>} : memref<8x128xf32, #tpu.memory_space<vmem>>, vector<8x128xf32>,
      %cst_97 = arith.constant 0xFF800000 : f32
      %427 = vector.broadcast %cst_97 : f32 to vector<8x128xf32>
      %c0_98 = arith.constant 0 : index
      %c0_99 = arith.constant 0 : index
      %428 = vector.load %arg10[%c0_98, %c0_99] : memref<8x128xf32, #tpu.memory_space<vmem>>, vector<8x128xf32>
      tpu.vector_store %arg10[%c0_98, %c0_99], %427 {strides = array<i32>} : memref<8x128xf32, #tpu.memory_space<vmem>>, vector<8x128xf32>,
    } else {
    }
    %c0 = arith.constant 0 : index
    %c0_1 = arith.constant 0 : index
    %3 = vector.load %arg2[%c0, %c0_1] : memref<8x1xi32, #tpu.memory_space<vmem>>, vector<8x1xi32>
    %c0_2 = arith.constant 0 : index
    %c0_3 = arith.constant 0 : index
    %4 = vector.load %arg3[%c0_2, %c0_3] : memref<128x512xf32, #tpu.memory_space<vmem>>, vector<128x512xf32>
    %c8_i32 = arith.constant 8 : i32
    %5 = arith.muli %arg0, %c8_i32 : i32
    %c0_4 = arith.constant 0 : index
    %c0_5 = arith.constant 0 : index
    %6 = vector.load %arg8[%c0_4, %c0_5] : memref<8x128xf32, #tpu.memory_space<vmem>>, vector<8x128xf32>
    %c0_6 = arith.constant 0 : index
    %c0_7 = arith.constant 0 : index
    %7 = vector.load %arg9[%c0_6, %c0_7] : memref<8x128xf32, #tpu.memory_space<vmem>>, vector<8x128xf32>
    %c0_8 = arith.constant 0 : index
    %c0_9 = arith.constant 0 : index
    %8 = vector.load %arg10[%c0_8, %c0_9] : memref<8x128xf32, #tpu.memory_space<vmem>>, vector<8x128xf32>
    %c0_i32_10 = arith.constant 0 : i32
    %9 = arith.index_cast %c0_i32_10 : i32 to index
    %c0_11 = arith.constant 0 : index
    %c0_12 = arith.constant 0 : index
    %10 = vector.load %arg1[%9, %c0_11, %c0_12] : memref<8x8x512xf32, #tpu.memory_space<vmem>>, vector<1x8x512xf32>
    %11 = vector.shape_cast %10 : vector<1x8x512xf32> to vector<8x512xf32>
    %cst = arith.constant dense<0.000000e+00> : vector<8x512xf32>
    %12 = tpu.matmul %6, %4, %cst {dimension_numbers = #tpu.dot_dimension_numbers<[1], [0], [0], [1], [0, 0, 1, 1], [], []>} : vector<8x128xf32>, vector<128x512xf32>, vector<8x512xf32> -> vector<8x512xf32>
    %13 = arith.addf %11, %12 : vector<8x512xf32>
    %14 = vector.extract_strided_slice %13 {offsets = [0, 0], sizes = [8, 128], strides = [1, 1]} : vector<8x512xf32> to vector<8x128xf32>
    %15 = arith.negf %14 : vector<8x128xf32>
    %16 = math.exp %15 : vector<8x128xf32>
    %cst_13 = arith.constant 1.000000e+00 : f32
    %17 = vector.broadcast %cst_13 : f32 to vector<8x128xf32>
    %18 = arith.addf %17, %16 : vector<8x128xf32>
    %19 = arith.divf %17, %18 : vector<8x128xf32>
    %20 = vector.extract_strided_slice %13 {offsets = [0, 128], sizes = [8, 128], strides = [1, 1]} : vector<8x512xf32> to vector<8x128xf32>
    %21 = arith.negf %20 : vector<8x128xf32>
    %22 = math.exp %21 : vector<8x128xf32>
    %cst_14 = arith.constant 1.000000e+00 : f32
    %23 = vector.broadcast %cst_14 : f32 to vector<8x128xf32>
    %24 = arith.addf %23, %22 : vector<8x128xf32>
    %25 = arith.divf %23, %24 : vector<8x128xf32>
    %26 = vector.extract_strided_slice %13 {offsets = [0, 256], sizes = [8, 128], strides = [1, 1]} : vector<8x512xf32> to vector<8x128xf32>
    %27 = math.tanh %26 : vector<8x128xf32>
    %28 = vector.extract_strided_slice %13 {offsets = [0, 384], sizes = [8, 128], strides = [1, 1]} : vector<8x512xf32> to vector<8x128xf32>
    %29 = arith.negf %28 : vector<8x128xf32>
    %30 = math.exp %29 : vector<8x128xf32>
    %cst_15 = arith.constant 1.000000e+00 : f32
    %31 = vector.broadcast %cst_15 : f32 to vector<8x128xf32>
    %32 = arith.addf %31, %30 : vector<8x128xf32>
    %33 = arith.divf %31, %32 : vector<8x128xf32>
    %34 = arith.mulf %25, %7 : vector<8x128xf32>
    %35 = arith.mulf %19, %27 : vector<8x128xf32>
    %36 = arith.addf %34, %35 : vector<8x128xf32>
    %37 = math.tanh %36 : vector<8x128xf32>
    %38 = arith.mulf %33, %37 : vector<8x128xf32>
    %39 = arith.addi %5, %c0_i32_10 : i32
    %40 = vector.broadcast %39 : i32 to vector<8x1xi32>
    %41 = arith.cmpi slt, %40, %3 : vector<8x1xi32>
    %42 = vector.shape_cast %41 : vector<8x1xi1> to vector<8x1xi1>
    %43 = vector.broadcast %42 : vector<8x1xi1> to vector<8x128xi1>
    %44 = arith.select %43, %38, %6 : vector<8x128xi1>, vector<8x128xf32>
    %45 = vector.shape_cast %41 : vector<8x1xi1> to vector<8x1xi1>
    %46 = vector.broadcast %45 : vector<8x1xi1> to vector<8x128xi1>
    %47 = arith.select %46, %36, %7 : vector<8x128xi1>, vector<8x128xf32>
    %cst_16 = arith.constant 0xFF800000 : f32
    %48 = vector.shape_cast %41 : vector<8x1xi1> to vector<8x1xi1>
    %49 = vector.broadcast %48 : vector<8x1xi1> to vector<8x128xi1>
    %50 = vector.broadcast %cst_16 : f32 to vector<8x128xf32>
    %51 = arith.select %49, %38, %50 : vector<8x128xi1>, vector<8x128xf32>
    %52 = arith.index_cast %c0_i32_10 : i32 to index
    %c0_17 = arith.constant 0 : index
    %c0_18 = arith.constant 0 : index
    %53 = vector.load %arg4[%52, %c0_17, %c0_18] : memref<8x8x128xf32, #tpu.memory_space<vmem>>, vector<1x8x128xf32>
    %54 = vector.shape_cast %53 : vector<1x8x128xf32> to vector<8x128xf32>
    %55 = vector.shape_cast %51 : vector<8x128xf32> to vector<1x8x128xf32>
    tpu.vector_store %arg4[%52, %c0_17, %c0_18], %55 {strides = array<i32>} : memref<8x8x128xf32, #tpu.memory_space<vmem>>, vector<1x8x128xf32>,
    %56 = arith.maximumf %8, %38 : vector<8x128xf32>
    %57 = vector.shape_cast %41 : vector<8x1xi1> to vector<8x1xi1>
    %58 = vector.broadcast %57 : vector<8x1xi1> to vector<8x128xi1>
    %59 = arith.select %58, %56, %8 : vector<8x128xi1>, vector<8x128xf32>
    %c1_i32 = arith.constant 1 : i32
    %60 = arith.index_cast %c1_i32 : i32 to index
    %c0_19 = arith.constant 0 : index
    %c0_20 = arith.constant 0 : index
    %61 = vector.load %arg1[%60, %c0_19, %c0_20] : memref<8x8x512xf32, #tpu.memory_space<vmem>>, vector<1x8x512xf32>
    %62 = vector.shape_cast %61 : vector<1x8x512xf32> to vector<8x512xf32>
    %cst_21 = arith.constant dense<0.000000e+00> : vector<8x512xf32>
    %63 = tpu.matmul %44, %4, %cst_21 {dimension_numbers = #tpu.dot_dimension_numbers<[1], [0], [0], [1], [0, 0, 1, 1], [], []>} : vector<8x128xf32>, vector<128x512xf32>, vector<8x512xf32> -> vector<8x512xf32>
    %64 = arith.addf %62, %63 : vector<8x512xf32>
    %65 = vector.extract_strided_slice %64 {offsets = [0, 0], sizes = [8, 128], strides = [1, 1]} : vector<8x512xf32> to vector<8x128xf32>
    %66 = arith.negf %65 : vector<8x128xf32>
    %67 = math.exp %66 : vector<8x128xf32>
    %cst_22 = arith.constant 1.000000e+00 : f32
    %68 = vector.broadcast %cst_22 : f32 to vector<8x128xf32>
    %69 = arith.addf %68, %67 : vector<8x128xf32>
    %70 = arith.divf %68, %69 : vector<8x128xf32>
    %71 = vector.extract_strided_slice %64 {offsets = [0, 128], sizes = [8, 128], strides = [1, 1]} : vector<8x512xf32> to vector<8x128xf32>
    %72 = arith.negf %71 : vector<8x128xf32>
    %73 = math.exp %72 : vector<8x128xf32>
    %cst_23 = arith.constant 1.000000e+00 : f32
    %74 = vector.broadcast %cst_23 : f32 to vector<8x128xf32>
    %75 = arith.addf %74, %73 : vector<8x128xf32>
    %76 = arith.divf %74, %75 : vector<8x128xf32>
    %77 = vector.extract_strided_slice %64 {offsets = [0, 256], sizes = [8, 128], strides = [1, 1]} : vector<8x512xf32> to vector<8x128xf32>
    %78 = math.tanh %77 : vector<8x128xf32>
    %79 = vector.extract_strided_slice %64 {offsets = [0, 384], sizes = [8, 128], strides = [1, 1]} : vector<8x512xf32> to vector<8x128xf32>
    %80 = arith.negf %79 : vector<8x128xf32>
    %81 = math.exp %80 : vector<8x128xf32>
    %cst_24 = arith.constant 1.000000e+00 : f32
    %82 = vector.broadcast %cst_24 : f32 to vector<8x128xf32>
    %83 = arith.addf %82, %81 : vector<8x128xf32>
    %84 = arith.divf %82, %83 : vector<8x128xf32>
    %85 = arith.mulf %76, %47 : vector<8x128xf32>
    %86 = arith.mulf %70, %78 : vector<8x128xf32>
    %87 = arith.addf %85, %86 : vector<8x128xf32>
    %88 = math.tanh %87 : vector<8x128xf32>
    %89 = arith.mulf %84, %88 : vector<8x128xf32>
    %90 = arith.addi %5, %c1_i32 : i32
    %91 = vector.broadcast %90 : i32 to vector<8x1xi32>
    %92 = arith.cmpi slt, %91, %3 : vector<8x1xi32>
    %93 = vector.shape_cast %92 : vector<8x1xi1> to vector<8x1xi1>
    %94 = vector.broadcast %93 : vector<8x1xi1> to vector<8x128xi1>
    %95 = arith.select %94, %89, %44 : vector<8x128xi1>, vector<8x128xf32>
    %96 = vector.shape_cast %92 : vector<8x1xi1> to vector<8x1xi1>
    %97 = vector.broadcast %96 : vector<8x1xi1> to vector<8x128xi1>
    %98 = arith.select %97, %87, %47 : vector<8x128xi1>, vector<8x128xf32>
    %cst_25 = arith.constant 0xFF800000 : f32
    %99 = vector.shape_cast %92 : vector<8x1xi1> to vector<8x1xi1>
    %100 = vector.broadcast %99 : vector<8x1xi1> to vector<8x128xi1>
    %101 = vector.broadcast %cst_25 : f32 to vector<8x128xf32>
    %102 = arith.select %100, %89, %101 : vector<8x128xi1>, vector<8x128xf32>
    %103 = arith.index_cast %c1_i32 : i32 to index
    %c0_26 = arith.constant 0 : index
    %c0_27 = arith.constant 0 : index
    %104 = vector.load %arg4[%103, %c0_26, %c0_27] : memref<8x8x128xf32, #tpu.memory_space<vmem>>, vector<1x8x128xf32>
    %105 = vector.shape_cast %104 : vector<1x8x128xf32> to vector<8x128xf32>
    %106 = vector.shape_cast %102 : vector<8x128xf32> to vector<1x8x128xf32>
    tpu.vector_store %arg4[%103, %c0_26, %c0_27], %106 {strides = array<i32>} : memref<8x8x128xf32, #tpu.memory_space<vmem>>, vector<1x8x128xf32>,
    %107 = arith.maximumf %59, %89 : vector<8x128xf32>
    %108 = vector.shape_cast %92 : vector<8x1xi1> to vector<8x1xi1>
    %109 = vector.broadcast %108 : vector<8x1xi1> to vector<8x128xi1>
    %110 = arith.select %109, %107, %59 : vector<8x128xi1>, vector<8x128xf32>
    %c2_i32 = arith.constant 2 : i32
    %111 = arith.index_cast %c2_i32 : i32 to index
    %c0_28 = arith.constant 0 : index
    %c0_29 = arith.constant 0 : index
    %112 = vector.load %arg1[%111, %c0_28, %c0_29] : memref<8x8x512xf32, #tpu.memory_space<vmem>>, vector<1x8x512xf32>
    %113 = vector.shape_cast %112 : vector<1x8x512xf32> to vector<8x512xf32>
    %cst_30 = arith.constant dense<0.000000e+00> : vector<8x512xf32>
    %114 = tpu.matmul %95, %4, %cst_30 {dimension_numbers = #tpu.dot_dimension_numbers<[1], [0], [0], [1], [0, 0, 1, 1], [], []>} : vector<8x128xf32>, vector<128x512xf32>, vector<8x512xf32> -> vector<8x512xf32>
    %115 = arith.addf %113, %114 : vector<8x512xf32>
    %116 = vector.extract_strided_slice %115 {offsets = [0, 0], sizes = [8, 128], strides = [1, 1]} : vector<8x512xf32> to vector<8x128xf32>
    %117 = arith.negf %116 : vector<8x128xf32>
    %118 = math.exp %117 : vector<8x128xf32>
    %cst_31 = arith.constant 1.000000e+00 : f32
    %119 = vector.broadcast %cst_31 : f32 to vector<8x128xf32>
    %120 = arith.addf %119, %118 : vector<8x128xf32>
    %121 = arith.divf %119, %120 : vector<8x128xf32>
    %122 = vector.extract_strided_slice %115 {offsets = [0, 128], sizes = [8, 128], strides = [1, 1]} : vector<8x512xf32> to vector<8x128xf32>
    %123 = arith.negf %122 : vector<8x128xf32>
    %124 = math.exp %123 : vector<8x128xf32>
    %cst_32 = arith.constant 1.000000e+00 : f32
    %125 = vector.broadcast %cst_32 : f32 to vector<8x128xf32>
    %126 = arith.addf %125, %124 : vector<8x128xf32>
    %127 = arith.divf %125, %126 : vector<8x128xf32>
    %128 = vector.extract_strided_slice %115 {offsets = [0, 256], sizes = [8, 128], strides = [1, 1]} : vector<8x512xf32> to vector<8x128xf32>
    %129 = math.tanh %128 : vector<8x128xf32>
    %130 = vector.extract_strided_slice %115 {offsets = [0, 384], sizes = [8, 128], strides = [1, 1]} : vector<8x512xf32> to vector<8x128xf32>
    %131 = arith.negf %130 : vector<8x128xf32>
    %132 = math.exp %131 : vector<8x128xf32>
    %cst_33 = arith.constant 1.000000e+00 : f32
    %133 = vector.broadcast %cst_33 : f32 to vector<8x128xf32>
    %134 = arith.addf %133, %132 : vector<8x128xf32>
    %135 = arith.divf %133, %134 : vector<8x128xf32>
    %136 = arith.mulf %127, %98 : vector<8x128xf32>
    %137 = arith.mulf %121, %129 : vector<8x128xf32>
    %138 = arith.addf %136, %137 : vector<8x128xf32>
    %139 = math.tanh %138 : vector<8x128xf32>
    %140 = arith.mulf %135, %139 : vector<8x128xf32>
    %141 = arith.addi %5, %c2_i32 : i32
    %142 = vector.broadcast %141 : i32 to vector<8x1xi32>
    %143 = arith.cmpi slt, %142, %3 : vector<8x1xi32>
    %144 = vector.shape_cast %143 : vector<8x1xi1> to vector<8x1xi1>
    %145 = vector.broadcast %144 : vector<8x1xi1> to vector<8x128xi1>
    %146 = arith.select %145, %140, %95 : vector<8x128xi1>, vector<8x128xf32>
    %147 = vector.shape_cast %143 : vector<8x1xi1> to vector<8x1xi1>
    %148 = vector.broadcast %147 : vector<8x1xi1> to vector<8x128xi1>
    %149 = arith.select %148, %138, %98 : vector<8x128xi1>, vector<8x128xf32>
    %cst_34 = arith.constant 0xFF800000 : f32
    %150 = vector.shape_cast %143 : vector<8x1xi1> to vector<8x1xi1>
    %151 = vector.broadcast %150 : vector<8x1xi1> to vector<8x128xi1>
    %152 = vector.broadcast %cst_34 : f32 to vector<8x128xf32>
    %153 = arith.select %151, %140, %152 : vector<8x128xi1>, vector<8x128xf32>
    %154 = arith.index_cast %c2_i32 : i32 to index
    %c0_35 = arith.constant 0 : index
    %c0_36 = arith.constant 0 : index
    %155 = vector.load %arg4[%154, %c0_35, %c0_36] : memref<8x8x128xf32, #tpu.memory_space<vmem>>, vector<1x8x128xf32>
    %156 = vector.shape_cast %155 : vector<1x8x128xf32> to vector<8x128xf32>
    %157 = vector.shape_cast %153 : vector<8x128xf32> to vector<1x8x128xf32>
    tpu.vector_store %arg4[%154, %c0_35, %c0_36], %157 {strides = array<i32>} : memref<8x8x128xf32, #tpu.memory_space<vmem>>, vector<1x8x128xf32>,
    %158 = arith.maximumf %110, %140 : vector<8x128xf32>
    %159 = vector.shape_cast %143 : vector<8x1xi1> to vector<8x1xi1>
    %160 = vector.broadcast %159 : vector<8x1xi1> to vector<8x128xi1>
    %161 = arith.select %160, %158, %110 : vector<8x128xi1>, vector<8x128xf32>
    %c3_i32 = arith.constant 3 : i32
    %162 = arith.index_cast %c3_i32 : i32 to index
    %c0_37 = arith.constant 0 : index
    %c0_38 = arith.constant 0 : index
    %163 = vector.load %arg1[%162, %c0_37, %c0_38] : memref<8x8x512xf32, #tpu.memory_space<vmem>>, vector<1x8x512xf32>
    %164 = vector.shape_cast %163 : vector<1x8x512xf32> to vector<8x512xf32>
    %cst_39 = arith.constant dense<0.000000e+00> : vector<8x512xf32>
    %165 = tpu.matmul %146, %4, %cst_39 {dimension_numbers = #tpu.dot_dimension_numbers<[1], [0], [0], [1], [0, 0, 1, 1], [], []>} : vector<8x128xf32>, vector<128x512xf32>, vector<8x512xf32> -> vector<8x512xf32>
    %166 = arith.addf %164, %165 : vector<8x512xf32>
    %167 = vector.extract_strided_slice %166 {offsets = [0, 0], sizes = [8, 128], strides = [1, 1]} : vector<8x512xf32> to vector<8x128xf32>
    %168 = arith.negf %167 : vector<8x128xf32>
    %169 = math.exp %168 : vector<8x128xf32>
    %cst_40 = arith.constant 1.000000e+00 : f32
    %170 = vector.broadcast %cst_40 : f32 to vector<8x128xf32>
    %171 = arith.addf %170, %169 : vector<8x128xf32>
    %172 = arith.divf %170, %171 : vector<8x128xf32>
    %173 = vector.extract_strided_slice %166 {offsets = [0, 128], sizes = [8, 128], strides = [1, 1]} : vector<8x512xf32> to vector<8x128xf32>
    %174 = arith.negf %173 : vector<8x128xf32>
    %175 = math.exp %174 : vector<8x128xf32>
    %cst_41 = arith.constant 1.000000e+00 : f32
    %176 = vector.broadcast %cst_41 : f32 to vector<8x128xf32>
    %177 = arith.addf %176, %175 : vector<8x128xf32>
    %178 = arith.divf %176, %177 : vector<8x128xf32>
    %179 = vector.extract_strided_slice %166 {offsets = [0, 256], sizes = [8, 128], strides = [1, 1]} : vector<8x512xf32> to vector<8x128xf32>
    %180 = math.tanh %179 : vector<8x128xf32>
    %181 = vector.extract_strided_slice %166 {offsets = [0, 384], sizes = [8, 128], strides = [1, 1]} : vector<8x512xf32> to vector<8x128xf32>
    %182 = arith.negf %181 : vector<8x128xf32>
    %183 = math.exp %182 : vector<8x128xf32>
    %cst_42 = arith.constant 1.000000e+00 : f32
    %184 = vector.broadcast %cst_42 : f32 to vector<8x128xf32>
    %185 = arith.addf %184, %183 : vector<8x128xf32>
    %186 = arith.divf %184, %185 : vector<8x128xf32>
    %187 = arith.mulf %178, %149 : vector<8x128xf32>
    %188 = arith.mulf %172, %180 : vector<8x128xf32>
    %189 = arith.addf %187, %188 : vector<8x128xf32>
    %190 = math.tanh %189 : vector<8x128xf32>
    %191 = arith.mulf %186, %190 : vector<8x128xf32>
    %192 = arith.addi %5, %c3_i32 : i32
    %193 = vector.broadcast %192 : i32 to vector<8x1xi32>
    %194 = arith.cmpi slt, %193, %3 : vector<8x1xi32>
    %195 = vector.shape_cast %194 : vector<8x1xi1> to vector<8x1xi1>
    %196 = vector.broadcast %195 : vector<8x1xi1> to vector<8x128xi1>
    %197 = arith.select %196, %191, %146 : vector<8x128xi1>, vector<8x128xf32>
    %198 = vector.shape_cast %194 : vector<8x1xi1> to vector<8x1xi1>
    %199 = vector.broadcast %198 : vector<8x1xi1> to vector<8x128xi1>
    %200 = arith.select %199, %189, %149 : vector<8x128xi1>, vector<8x128xf32>
    %cst_43 = arith.constant 0xFF800000 : f32
    %201 = vector.shape_cast %194 : vector<8x1xi1> to vector<8x1xi1>
    %202 = vector.broadcast %201 : vector<8x1xi1> to vector<8x128xi1>
    %203 = vector.broadcast %cst_43 : f32 to vector<8x128xf32>
    %204 = arith.select %202, %191, %203 : vector<8x128xi1>, vector<8x128xf32>
    %205 = arith.index_cast %c3_i32 : i32 to index
    %c0_44 = arith.constant 0 : index
    %c0_45 = arith.constant 0 : index
    %206 = vector.load %arg4[%205, %c0_44, %c0_45] : memref<8x8x128xf32, #tpu.memory_space<vmem>>, vector<1x8x128xf32>
    %207 = vector.shape_cast %206 : vector<1x8x128xf32> to vector<8x128xf32>
    %208 = vector.shape_cast %204 : vector<8x128xf32> to vector<1x8x128xf32>
    tpu.vector_store %arg4[%205, %c0_44, %c0_45], %208 {strides = array<i32>} : memref<8x8x128xf32, #tpu.memory_space<vmem>>, vector<1x8x128xf32>,
    %209 = arith.maximumf %161, %191 : vector<8x128xf32>
    %210 = vector.shape_cast %194 : vector<8x1xi1> to vector<8x1xi1>
    %211 = vector.broadcast %210 : vector<8x1xi1> to vector<8x128xi1>
    %212 = arith.select %211, %209, %161 : vector<8x128xi1>, vector<8x128xf32>
    %c4_i32 = arith.constant 4 : i32
    %213 = arith.index_cast %c4_i32 : i32 to index
    %c0_46 = arith.constant 0 : index
    %c0_47 = arith.constant 0 : index
    %214 = vector.load %arg1[%213, %c0_46, %c0_47] : memref<8x8x512xf32, #tpu.memory_space<vmem>>, vector<1x8x512xf32>
    %215 = vector.shape_cast %214 : vector<1x8x512xf32> to vector<8x512xf32>
    %cst_48 = arith.constant dense<0.000000e+00> : vector<8x512xf32>
    %216 = tpu.matmul %197, %4, %cst_48 {dimension_numbers = #tpu.dot_dimension_numbers<[1], [0], [0], [1], [0, 0, 1, 1], [], []>} : vector<8x128xf32>, vector<128x512xf32>, vector<8x512xf32> -> vector<8x512xf32>
    %217 = arith.addf %215, %216 : vector<8x512xf32>
    %218 = vector.extract_strided_slice %217 {offsets = [0, 0], sizes = [8, 128], strides = [1, 1]} : vector<8x512xf32> to vector<8x128xf32>
    %219 = arith.negf %218 : vector<8x128xf32>
    %220 = math.exp %219 : vector<8x128xf32>
    %cst_49 = arith.constant 1.000000e+00 : f32
    %221 = vector.broadcast %cst_49 : f32 to vector<8x128xf32>
    %222 = arith.addf %221, %220 : vector<8x128xf32>
    %223 = arith.divf %221, %222 : vector<8x128xf32>
    %224 = vector.extract_strided_slice %217 {offsets = [0, 128], sizes = [8, 128], strides = [1, 1]} : vector<8x512xf32> to vector<8x128xf32>
    %225 = arith.negf %224 : vector<8x128xf32>
    %226 = math.exp %225 : vector<8x128xf32>
    %cst_50 = arith.constant 1.000000e+00 : f32
    %227 = vector.broadcast %cst_50 : f32 to vector<8x128xf32>
    %228 = arith.addf %227, %226 : vector<8x128xf32>
    %229 = arith.divf %227, %228 : vector<8x128xf32>
    %230 = vector.extract_strided_slice %217 {offsets = [0, 256], sizes = [8, 128], strides = [1, 1]} : vector<8x512xf32> to vector<8x128xf32>
    %231 = math.tanh %230 : vector<8x128xf32>
    %232 = vector.extract_strided_slice %217 {offsets = [0, 384], sizes = [8, 128], strides = [1, 1]} : vector<8x512xf32> to vector<8x128xf32>
    %233 = arith.negf %232 : vector<8x128xf32>
    %234 = math.exp %233 : vector<8x128xf32>
    %cst_51 = arith.constant 1.000000e+00 : f32
    %235 = vector.broadcast %cst_51 : f32 to vector<8x128xf32>
    %236 = arith.addf %235, %234 : vector<8x128xf32>
    %237 = arith.divf %235, %236 : vector<8x128xf32>
    %238 = arith.mulf %229, %200 : vector<8x128xf32>
    %239 = arith.mulf %223, %231 : vector<8x128xf32>
    %240 = arith.addf %238, %239 : vector<8x128xf32>
    %241 = math.tanh %240 : vector<8x128xf32>
    %242 = arith.mulf %237, %241 : vector<8x128xf32>
    %243 = arith.addi %5, %c4_i32 : i32
    %244 = vector.broadcast %243 : i32 to vector<8x1xi32>
    %245 = arith.cmpi slt, %244, %3 : vector<8x1xi32>
    %246 = vector.shape_cast %245 : vector<8x1xi1> to vector<8x1xi1>
    %247 = vector.broadcast %246 : vector<8x1xi1> to vector<8x128xi1>
    %248 = arith.select %247, %242, %197 : vector<8x128xi1>, vector<8x128xf32>
    %249 = vector.shape_cast %245 : vector<8x1xi1> to vector<8x1xi1>
    %250 = vector.broadcast %249 : vector<8x1xi1> to vector<8x128xi1>
    %251 = arith.select %250, %240, %200 : vector<8x128xi1>, vector<8x128xf32>
    %cst_52 = arith.constant 0xFF800000 : f32
    %252 = vector.shape_cast %245 : vector<8x1xi1> to vector<8x1xi1>
    %253 = vector.broadcast %252 : vector<8x1xi1> to vector<8x128xi1>
    %254 = vector.broadcast %cst_52 : f32 to vector<8x128xf32>
    %255 = arith.select %253, %242, %254 : vector<8x128xi1>, vector<8x128xf32>
    %256 = arith.index_cast %c4_i32 : i32 to index
    %c0_53 = arith.constant 0 : index
    %c0_54 = arith.constant 0 : index
    %257 = vector.load %arg4[%256, %c0_53, %c0_54] : memref<8x8x128xf32, #tpu.memory_space<vmem>>, vector<1x8x128xf32>
    %258 = vector.shape_cast %257 : vector<1x8x128xf32> to vector<8x128xf32>
    %259 = vector.shape_cast %255 : vector<8x128xf32> to vector<1x8x128xf32>
    tpu.vector_store %arg4[%256, %c0_53, %c0_54], %259 {strides = array<i32>} : memref<8x8x128xf32, #tpu.memory_space<vmem>>, vector<1x8x128xf32>,
    %260 = arith.maximumf %212, %242 : vector<8x128xf32>
    %261 = vector.shape_cast %245 : vector<8x1xi1> to vector<8x1xi1>
    %262 = vector.broadcast %261 : vector<8x1xi1> to vector<8x128xi1>
    %263 = arith.select %262, %260, %212 : vector<8x128xi1>, vector<8x128xf32>
    %c5_i32 = arith.constant 5 : i32
    %264 = arith.index_cast %c5_i32 : i32 to index
    %c0_55 = arith.constant 0 : index
    %c0_56 = arith.constant 0 : index
    %265 = vector.load %arg1[%264, %c0_55, %c0_56] : memref<8x8x512xf32, #tpu.memory_space<vmem>>, vector<1x8x512xf32>
    %266 = vector.shape_cast %265 : vector<1x8x512xf32> to vector<8x512xf32>
    %cst_57 = arith.constant dense<0.000000e+00> : vector<8x512xf32>
    %267 = tpu.matmul %248, %4, %cst_57 {dimension_numbers = #tpu.dot_dimension_numbers<[1], [0], [0], [1], [0, 0, 1, 1], [], []>} : vector<8x128xf32>, vector<128x512xf32>, vector<8x512xf32> -> vector<8x512xf32>
    %268 = arith.addf %266, %267 : vector<8x512xf32>
    %269 = vector.extract_strided_slice %268 {offsets = [0, 0], sizes = [8, 128], strides = [1, 1]} : vector<8x512xf32> to vector<8x128xf32>
    %270 = arith.negf %269 : vector<8x128xf32>
    %271 = math.exp %270 : vector<8x128xf32>
    %cst_58 = arith.constant 1.000000e+00 : f32
    %272 = vector.broadcast %cst_58 : f32 to vector<8x128xf32>
    %273 = arith.addf %272, %271 : vector<8x128xf32>
    %274 = arith.divf %272, %273 : vector<8x128xf32>
    %275 = vector.extract_strided_slice %268 {offsets = [0, 128], sizes = [8, 128], strides = [1, 1]} : vector<8x512xf32> to vector<8x128xf32>
    %276 = arith.negf %275 : vector<8x128xf32>
    %277 = math.exp %276 : vector<8x128xf32>
    %cst_59 = arith.constant 1.000000e+00 : f32
    %278 = vector.broadcast %cst_59 : f32 to vector<8x128xf32>
    %279 = arith.addf %278, %277 : vector<8x128xf32>
    %280 = arith.divf %278, %279 : vector<8x128xf32>
    %281 = vector.extract_strided_slice %268 {offsets = [0, 256], sizes = [8, 128], strides = [1, 1]} : vector<8x512xf32> to vector<8x128xf32>
    %282 = math.tanh %281 : vector<8x128xf32>
    %283 = vector.extract_strided_slice %268 {offsets = [0, 384], sizes = [8, 128], strides = [1, 1]} : vector<8x512xf32> to vector<8x128xf32>
    %284 = arith.negf %283 : vector<8x128xf32>
    %285 = math.exp %284 : vector<8x128xf32>
    %cst_60 = arith.constant 1.000000e+00 : f32
    %286 = vector.broadcast %cst_60 : f32 to vector<8x128xf32>
    %287 = arith.addf %286, %285 : vector<8x128xf32>
    %288 = arith.divf %286, %287 : vector<8x128xf32>
    %289 = arith.mulf %280, %251 : vector<8x128xf32>
    %290 = arith.mulf %274, %282 : vector<8x128xf32>
    %291 = arith.addf %289, %290 : vector<8x128xf32>
    %292 = math.tanh %291 : vector<8x128xf32>
    %293 = arith.mulf %288, %292 : vector<8x128xf32>
    %294 = arith.addi %5, %c5_i32 : i32
    %295 = vector.broadcast %294 : i32 to vector<8x1xi32>
    %296 = arith.cmpi slt, %295, %3 : vector<8x1xi32>
    %297 = vector.shape_cast %296 : vector<8x1xi1> to vector<8x1xi1>
    %298 = vector.broadcast %297 : vector<8x1xi1> to vector<8x128xi1>
    %299 = arith.select %298, %293, %248 : vector<8x128xi1>, vector<8x128xf32>
    %300 = vector.shape_cast %296 : vector<8x1xi1> to vector<8x1xi1>
    %301 = vector.broadcast %300 : vector<8x1xi1> to vector<8x128xi1>
    %302 = arith.select %301, %291, %251 : vector<8x128xi1>, vector<8x128xf32>
    %cst_61 = arith.constant 0xFF800000 : f32
    %303 = vector.shape_cast %296 : vector<8x1xi1> to vector<8x1xi1>
    %304 = vector.broadcast %303 : vector<8x1xi1> to vector<8x128xi1>
    %305 = vector.broadcast %cst_61 : f32 to vector<8x128xf32>
    %306 = arith.select %304, %293, %305 : vector<8x128xi1>, vector<8x128xf32>
    %307 = arith.index_cast %c5_i32 : i32 to index
    %c0_62 = arith.constant 0 : index
    %c0_63 = arith.constant 0 : index
    %308 = vector.load %arg4[%307, %c0_62, %c0_63] : memref<8x8x128xf32, #tpu.memory_space<vmem>>, vector<1x8x128xf32>
    %309 = vector.shape_cast %308 : vector<1x8x128xf32> to vector<8x128xf32>
    %310 = vector.shape_cast %306 : vector<8x128xf32> to vector<1x8x128xf32>
    tpu.vector_store %arg4[%307, %c0_62, %c0_63], %310 {strides = array<i32>} : memref<8x8x128xf32, #tpu.memory_space<vmem>>, vector<1x8x128xf32>,
    %311 = arith.maximumf %263, %293 : vector<8x128xf32>
    %312 = vector.shape_cast %296 : vector<8x1xi1> to vector<8x1xi1>
    %313 = vector.broadcast %312 : vector<8x1xi1> to vector<8x128xi1>
    %314 = arith.select %313, %311, %263 : vector<8x128xi1>, vector<8x128xf32>
    %c6_i32 = arith.constant 6 : i32
    %315 = arith.index_cast %c6_i32 : i32 to index
    %c0_64 = arith.constant 0 : index
    %c0_65 = arith.constant 0 : index
    %316 = vector.load %arg1[%315, %c0_64, %c0_65] : memref<8x8x512xf32, #tpu.memory_space<vmem>>, vector<1x8x512xf32>
    %317 = vector.shape_cast %316 : vector<1x8x512xf32> to vector<8x512xf32>
    %cst_66 = arith.constant dense<0.000000e+00> : vector<8x512xf32>
    %318 = tpu.matmul %299, %4, %cst_66 {dimension_numbers = #tpu.dot_dimension_numbers<[1], [0], [0], [1], [0, 0, 1, 1], [], []>} : vector<8x128xf32>, vector<128x512xf32>, vector<8x512xf32> -> vector<8x512xf32>
    %319 = arith.addf %317, %318 : vector<8x512xf32>
    %320 = vector.extract_strided_slice %319 {offsets = [0, 0], sizes = [8, 128], strides = [1, 1]} : vector<8x512xf32> to vector<8x128xf32>
    %321 = arith.negf %320 : vector<8x128xf32>
    %322 = math.exp %321 : vector<8x128xf32>
    %cst_67 = arith.constant 1.000000e+00 : f32
    %323 = vector.broadcast %cst_67 : f32 to vector<8x128xf32>
    %324 = arith.addf %323, %322 : vector<8x128xf32>
    %325 = arith.divf %323, %324 : vector<8x128xf32>
    %326 = vector.extract_strided_slice %319 {offsets = [0, 128], sizes = [8, 128], strides = [1, 1]} : vector<8x512xf32> to vector<8x128xf32>
    %327 = arith.negf %326 : vector<8x128xf32>
    %328 = math.exp %327 : vector<8x128xf32>
    %cst_68 = arith.constant 1.000000e+00 : f32
    %329 = vector.broadcast %cst_68 : f32 to vector<8x128xf32>
    %330 = arith.addf %329, %328 : vector<8x128xf32>
    %331 = arith.divf %329, %330 : vector<8x128xf32>
    %332 = vector.extract_strided_slice %319 {offsets = [0, 256], sizes = [8, 128], strides = [1, 1]} : vector<8x512xf32> to vector<8x128xf32>
    %333 = math.tanh %332 : vector<8x128xf32>
    %334 = vector.extract_strided_slice %319 {offsets = [0, 384], sizes = [8, 128], strides = [1, 1]} : vector<8x512xf32> to vector<8x128xf32>
    %335 = arith.negf %334 : vector<8x128xf32>
    %336 = math.exp %335 : vector<8x128xf32>
    %cst_69 = arith.constant 1.000000e+00 : f32
    %337 = vector.broadcast %cst_69 : f32 to vector<8x128xf32>
    %338 = arith.addf %337, %336 : vector<8x128xf32>
    %339 = arith.divf %337, %338 : vector<8x128xf32>
    %340 = arith.mulf %331, %302 : vector<8x128xf32>
    %341 = arith.mulf %325, %333 : vector<8x128xf32>
    %342 = arith.addf %340, %341 : vector<8x128xf32>
    %343 = math.tanh %342 : vector<8x128xf32>
    %344 = arith.mulf %339, %343 : vector<8x128xf32>
    %345 = arith.addi %5, %c6_i32 : i32
    %346 = vector.broadcast %345 : i32 to vector<8x1xi32>
    %347 = arith.cmpi slt, %346, %3 : vector<8x1xi32>
    %348 = vector.shape_cast %347 : vector<8x1xi1> to vector<8x1xi1>
    %349 = vector.broadcast %348 : vector<8x1xi1> to vector<8x128xi1>
    %350 = arith.select %349, %344, %299 : vector<8x128xi1>, vector<8x128xf32>
    %351 = vector.shape_cast %347 : vector<8x1xi1> to vector<8x1xi1>
    %352 = vector.broadcast %351 : vector<8x1xi1> to vector<8x128xi1>
    %353 = arith.select %352, %342, %302 : vector<8x128xi1>, vector<8x128xf32>
    %cst_70 = arith.constant 0xFF800000 : f32
    %354 = vector.shape_cast %347 : vector<8x1xi1> to vector<8x1xi1>
    %355 = vector.broadcast %354 : vector<8x1xi1> to vector<8x128xi1>
    %356 = vector.broadcast %cst_70 : f32 to vector<8x128xf32>
    %357 = arith.select %355, %344, %356 : vector<8x128xi1>, vector<8x128xf32>
    %358 = arith.index_cast %c6_i32 : i32 to index
    %c0_71 = arith.constant 0 : index
    %c0_72 = arith.constant 0 : index
    %359 = vector.load %arg4[%358, %c0_71, %c0_72] : memref<8x8x128xf32, #tpu.memory_space<vmem>>, vector<1x8x128xf32>
    %360 = vector.shape_cast %359 : vector<1x8x128xf32> to vector<8x128xf32>
    %361 = vector.shape_cast %357 : vector<8x128xf32> to vector<1x8x128xf32>
    tpu.vector_store %arg4[%358, %c0_71, %c0_72], %361 {strides = array<i32>} : memref<8x8x128xf32, #tpu.memory_space<vmem>>, vector<1x8x128xf32>,
    %362 = arith.maximumf %314, %344 : vector<8x128xf32>
    %363 = vector.shape_cast %347 : vector<8x1xi1> to vector<8x1xi1>
    %364 = vector.broadcast %363 : vector<8x1xi1> to vector<8x128xi1>
    %365 = arith.select %364, %362, %314 : vector<8x128xi1>, vector<8x128xf32>
    %c7_i32 = arith.constant 7 : i32
    %366 = arith.index_cast %c7_i32 : i32 to index
    %c0_73 = arith.constant 0 : index
    %c0_74 = arith.constant 0 : index
    %367 = vector.load %arg1[%366, %c0_73, %c0_74] : memref<8x8x512xf32, #tpu.memory_space<vmem>>, vector<1x8x512xf32>
    %368 = vector.shape_cast %367 : vector<1x8x512xf32> to vector<8x512xf32>
    %cst_75 = arith.constant dense<0.000000e+00> : vector<8x512xf32>
    %369 = tpu.matmul %350, %4, %cst_75 {dimension_numbers = #tpu.dot_dimension_numbers<[1], [0], [0], [1], [0, 0, 1, 1], [], []>} : vector<8x128xf32>, vector<128x512xf32>, vector<8x512xf32> -> vector<8x512xf32>
    %370 = arith.addf %368, %369 : vector<8x512xf32>
    %371 = vector.extract_strided_slice %370 {offsets = [0, 0], sizes = [8, 128], strides = [1, 1]} : vector<8x512xf32> to vector<8x128xf32>
    %372 = arith.negf %371 : vector<8x128xf32>
    %373 = math.exp %372 : vector<8x128xf32>
    %cst_76 = arith.constant 1.000000e+00 : f32
    %374 = vector.broadcast %cst_76 : f32 to vector<8x128xf32>
    %375 = arith.addf %374, %373 : vector<8x128xf32>
    %376 = arith.divf %374, %375 : vector<8x128xf32>
    %377 = vector.extract_strided_slice %370 {offsets = [0, 128], sizes = [8, 128], strides = [1, 1]} : vector<8x512xf32> to vector<8x128xf32>
    %378 = arith.negf %377 : vector<8x128xf32>
    %379 = math.exp %378 : vector<8x128xf32>
    %cst_77 = arith.constant 1.000000e+00 : f32
    %380 = vector.broadcast %cst_77 : f32 to vector<8x128xf32>
    %381 = arith.addf %380, %379 : vector<8x128xf32>
    %382 = arith.divf %380, %381 : vector<8x128xf32>
    %383 = vector.extract_strided_slice %370 {offsets = [0, 256], sizes = [8, 128], strides = [1, 1]} : vector<8x512xf32> to vector<8x128xf32>
    %384 = math.tanh %383 : vector<8x128xf32>
    %385 = vector.extract_strided_slice %370 {offsets = [0, 384], sizes = [8, 128], strides = [1, 1]} : vector<8x512xf32> to vector<8x128xf32>
    %386 = arith.negf %385 : vector<8x128xf32>
    %387 = math.exp %386 : vector<8x128xf32>
    %cst_78 = arith.constant 1.000000e+00 : f32
    %388 = vector.broadcast %cst_78 : f32 to vector<8x128xf32>
    %389 = arith.addf %388, %387 : vector<8x128xf32>
    %390 = arith.divf %388, %389 : vector<8x128xf32>
    %391 = arith.mulf %382, %353 : vector<8x128xf32>
    %392 = arith.mulf %376, %384 : vector<8x128xf32>
    %393 = arith.addf %391, %392 : vector<8x128xf32>
    %394 = math.tanh %393 : vector<8x128xf32>
    %395 = arith.mulf %390, %394 : vector<8x128xf32>
    %396 = arith.addi %5, %c7_i32 : i32
    %397 = vector.broadcast %396 : i32 to vector<8x1xi32>
    %398 = arith.cmpi slt, %397, %3 : vector<8x1xi32>
    %399 = vector.shape_cast %398 : vector<8x1xi1> to vector<8x1xi1>
    %400 = vector.broadcast %399 : vector<8x1xi1> to vector<8x128xi1>
    %401 = arith.select %400, %395, %350 : vector<8x128xi1>, vector<8x128xf32>
    %402 = vector.shape_cast %398 : vector<8x1xi1> to vector<8x1xi1>
    %403 = vector.broadcast %402 : vector<8x1xi1> to vector<8x128xi1>
    %404 = arith.select %403, %393, %353 : vector<8x128xi1>, vector<8x128xf32>
    %cst_79 = arith.constant 0xFF800000 : f32
    %405 = vector.shape_cast %398 : vector<8x1xi1> to vector<8x1xi1>
    %406 = vector.broadcast %405 : vector<8x1xi1> to vector<8x128xi1>
    %407 = vector.broadcast %cst_79 : f32 to vector<8x128xf32>
    %408 = arith.select %406, %395, %407 : vector<8x128xi1>, vector<8x128xf32>
    %409 = arith.index_cast %c7_i32 : i32 to index
    %c0_80 = arith.constant 0 : index
    %c0_81 = arith.constant 0 : index
    %410 = vector.load %arg4[%409, %c0_80, %c0_81] : memref<8x8x128xf32, #tpu.memory_space<vmem>>, vector<1x8x128xf32>
    %411 = vector.shape_cast %410 : vector<1x8x128xf32> to vector<8x128xf32>
    %412 = vector.shape_cast %408 : vector<8x128xf32> to vector<1x8x128xf32>
    tpu.vector_store %arg4[%409, %c0_80, %c0_81], %412 {strides = array<i32>} : memref<8x8x128xf32, #tpu.memory_space<vmem>>, vector<1x8x128xf32>,
    %413 = arith.maximumf %365, %395 : vector<8x128xf32>
    %414 = vector.shape_cast %398 : vector<8x1xi1> to vector<8x1xi1>
    %415 = vector.broadcast %414 : vector<8x1xi1> to vector<8x128xi1>
    %416 = arith.select %415, %413, %365 : vector<8x128xi1>, vector<8x128xf32>
    %c8_i32_82 = arith.constant 8 : i32
    %c0_83 = arith.constant 0 : index
    %c0_84 = arith.constant 0 : index
    %417 = vector.load %arg8[%c0_83, %c0_84] : memref<8x128xf32, #tpu.memory_space<vmem>>, vector<8x128xf32>
    tpu.vector_store %arg8[%c0_83, %c0_84], %401 {strides = array<i32>} : memref<8x128xf32, #tpu.memory_space<vmem>>, vector<8x128xf32>,
    %c0_85 = arith.constant 0 : index
    %c0_86 = arith.constant 0 : index
    %418 = vector.load %arg9[%c0_85, %c0_86] : memref<8x128xf32, #tpu.memory_space<vmem>>, vector<8x128xf32>
    tpu.vector_store %arg9[%c0_85, %c0_86], %404 {strides = array<i32>} : memref<8x128xf32, #tpu.memory_space<vmem>>, vector<8x128xf32>,
    %c0_87 = arith.constant 0 : index
    %c0_88 = arith.constant 0 : index
    %419 = vector.load %arg10[%c0_87, %c0_88] : memref<8x128xf32, #tpu.memory_space<vmem>>, vector<8x128xf32>
    tpu.vector_store %arg10[%c0_87, %c0_88], %416 {strides = array<i32>} : memref<8x128xf32, #tpu.memory_space<vmem>>, vector<8x128xf32>,
    %c0_i32_89 = arith.constant 0 : i32
    %420 = arith.cmpi eq, %arg0, %c0_i32_89 : i32
    %421 = arith.extui %420 : i1 to i32
    %c0_i32_90 = arith.constant 0 : i32
    %422 = arith.cmpi ne, %421, %c0_i32_90 : i32
    scf.if %422 {
      %c0_91 = arith.constant 0 : index
      %c0_92 = arith.constant 0 : index
      %423 = vector.load %arg8[%c0_91, %c0_92] : memref<8x128xf32, #tpu.memory_space<vmem>>, vector<8x128xf32>
      %c0_93 = arith.constant 0 : index
      %c0_94 = arith.constant 0 : index
      %c0_95 = arith.constant 0 : index
      %424 = vector.load %arg5[%c0_93, %c0_94, %c0_95] : memref<1x8x128xf32, #tpu.memory_space<vmem>>, vector<1x8x128xf32>
      %425 = vector.shape_cast %424 : vector<1x8x128xf32> to vector<8x128xf32>
      %426 = vector.shape_cast %423 : vector<8x128xf32> to vector<1x8x128xf32>
      tpu.vector_store %arg5[%c0_93, %c0_94, %c0_95], %426 {strides = array<i32>} : memref<1x8x128xf32, #tpu.memory_space<vmem>>, vector<1x8x128xf32>,
      %c0_96 = arith.constant 0 : index
      %c0_97 = arith.constant 0 : index
      %427 = vector.load %arg9[%c0_96, %c0_97] : memref<8x128xf32, #tpu.memory_space<vmem>>, vector<8x128xf32>
      %c0_98 = arith.constant 0 : index
      %c0_99 = arith.constant 0 : index
      %c0_100 = arith.constant 0 : index
      %428 = vector.load %arg6[%c0_98, %c0_99, %c0_100] : memref<1x8x128xf32, #tpu.memory_space<vmem>>, vector<1x8x128xf32>
      %429 = vector.shape_cast %428 : vector<1x8x128xf32> to vector<8x128xf32>
      %430 = vector.shape_cast %427 : vector<8x128xf32> to vector<1x8x128xf32>
      tpu.vector_store %arg6[%c0_98, %c0_99, %c0_100], %430 {strides = array<i32>} : memref<1x8x128xf32, #tpu.memory_space<vmem>>, vector<1x8x128xf32>,
      %c0_101 = arith.constant 0 : index
      %c0_102 = arith.constant 0 : index
      %431 = vector.load %arg10[%c0_101, %c0_102] : memref<8x128xf32, #tpu.memory_space<vmem>>, vector<8x128xf32>
      %c0_103 = arith.constant 0 : index
      %c0_104 = arith.constant 0 : index
      %432 = vector.load %arg7[%c0_103, %c0_104] : memref<8x128xf32, #tpu.memory_space<vmem>>, vector<8x128xf32>
      tpu.vector_store %arg7[%c0_103, %c0_104], %431 {strides = array<i32>} : memref<8x128xf32, #tpu.memory_space<vmem>>, vector<8x128xf32>,
    } else {
    }
    return
  }
  func.func @transform_0(%arg0: i32) -> (i32, i32, i32) {
    %c0_i32 = arith.constant 0 : i32
    %c0_i32_0 = arith.constant 0 : i32
    %c0_i32_1 = arith.constant 0 : i32
    return %arg0, %c0_i32, %c0_i32_0 : i32, i32, i32
  }
  func.func @transform_1(%arg0: i32) -> (i32, i32) {
    %c0_i32 = arith.constant 0 : i32
    %c0_i32_0 = arith.constant 0 : i32
    %c0_i32_1 = arith.constant 0 : i32
    return %c0_i32, %c0_i32_0 : i32, i32
  }
  func.func @transform_2(%arg0: i32) -> (i32, i32) {
    %c0_i32 = arith.constant 0 : i32
    %c0_i32_0 = arith.constant 0 : i32
    %c0_i32_1 = arith.constant 0 : i32
    return %c0_i32, %c0_i32_0 : i32, i32
  }
  func.func @transform_3(%arg0: i32) -> (i32, i32, i32) {
    %c0_i32 = arith.constant 0 : i32
    %c0_i32_0 = arith.constant 0 : i32
    %c0_i32_1 = arith.constant 0 : i32
    return %arg0, %c0_i32, %c0_i32_0 : i32, i32, i32
  }
  func.func @transform_4(%arg0: i32) -> (i32, i32, i32) {
    %c0_i32 = arith.constant 0 : i32
    %c0_i32_0 = arith.constant 0 : i32
    %c0_i32_1 = arith.constant 0 : i32
    %c0_i32_2 = arith.constant 0 : i32
    return %c0_i32, %c0_i32_0, %c0_i32_1 : i32, i32, i32
  }
  func.func @transform_5(%arg0: i32) -> (i32, i32, i32) {
    %c0_i32 = arith.constant 0 : i32
    %c0_i32_0 = arith.constant 0 : i32
    %c0_i32_1 = arith.constant 0 : i32
    %c0_i32_2 = arith.constant 0 : i32
    return %c0_i32, %c0_i32_0, %c0_i32_1 : i32, i32, i32
  }
  func.func @transform_6(%arg0: i32) -> (i32, i32) {
    %c0_i32 = arith.constant 0 : i32
    %c0_i32_0 = arith.constant 0 : i32
    %c0_i32_1 = arith.constant 0 : i32
    return %c0_i32, %c0_i32_0 : i32, i32
  }
}

</mosaic_0001>

<llo_original>
// kernel: _encoder_core.1
$region0: #{_encoder_core.1}
  #allocation0 [shape = 'u32[]', space=smem, size = 0x4, offset = 0x4, fixed_abs, tag = 'smem constant byte address 0x4 - core index']
  #allocation1 [shape = 'u32[144,128]{1,0:T(1,128)}', space=vmem, size = 0x12000, scoped, tag = 'internal scratch']
  #allocation2 [shape = 'f32[8,128]{1,0:T(8,128)}', space=vmem, size = 0x1000, scoped, tag = 'scratch operand']
  #allocation3 [shape = 'f32[8,128]{1,0:T(8,128)}', space=vmem, size = 0x1000, scoped, tag = 'scratch operand']
  #allocation4 [shape = 'f32[8,128]{1,0:T(8,128)}', space=vmem, size = 0x1000, scoped, tag = 'scratch operand']
  %s0 = inlined_call_operand.vmem [shape: f32[8,8,512], index: 0, kind: input, shape index: {}]
  %s1 = inlined_call_operand.vmem [shape: s32[8,1], index: 1, kind: input, shape index: {}]
  %s2 = inlined_call_operand.vmem [shape: f32[128,512], index: 2, kind: input, shape index: {}]
  %s3 = inlined_call_operand.vmem [shape: f32[8,8,128], index: 3, kind: output, shape index: {0}]
  %s4 = inlined_call_operand.vmem [shape: f32[1,8,128], index: 4, kind: output, shape index: {1}]
  %s5 = inlined_call_operand.vmem [shape: f32[1,8,128], index: 5, kind: output, shape index: {2}]
  %s6 = inlined_call_operand.vmem [shape: f32[8,128], index: 6, kind: output, shape index: {3}]
  %7 = xla_tuple %s3, %s4, %s5, %s6
  %s8 = sld [smem:[#allocation0]]
  $region54: #{_encoder_core.1} parent=0
    _
  %s10 = ssub.s32 1, %s8
  %s11 = scalar_select 0, %s10, %s8
  // Predicated region
  $region2: #{_encoder_core.1} parent=0 // pred_check
    _
  $region3: #{_encoder_core.1} parent=0 // pred_check_branch
    %13 = sbr.rel (0) target = $region5
  $region4: #{_encoder_core.1} parent=0 // pred_region
    _
  $region5: #{_encoder_core.1} parent=0 // pred_fallthru
    _
  // Predicated region
  $region6: #{_encoder_core.1} parent=0 // pred_check
    _
  $region7: #{_encoder_core.1} parent=0 // pred_check_branch
    %15 = sbr.rel (0) target = $region9
  $region8: #{_encoder_core.1} parent=0 // pred_region
    _
  $region9: #{_encoder_core.1} parent=0 // pred_fallthru
    _
  // Predicated region
  $region10: #{_encoder_core.1} parent=0 // pred_check
    _
  $region11: #{_encoder_core.1} parent=0 // pred_check_branch
    %17 = sbr.rel (0) target = $region13
  $region12: #{_encoder_core.1} parent=0 // pred_region
    _
  $region13: #{_encoder_core.1} parent=0 // pred_fallthru
    _
  %p18 = scmp.eq.s32.totalorder 0, 0
  // Predicated region
  $region14: #{_encoder_core.1} parent=0 // pred_check
    %p19 = pneg %p18
  $region15: #{_encoder_core.1} parent=0 // pred_check_branch
    %21 = sbr.rel (%p19) target = $region17
  $region16: #{_encoder_core.1} parent=0 // pred_region
    %22 = vst [vmem:[#allocation2] sm:$0xff] 0.0
    %23 = vst [vmem:[#allocation3] sm:$0xff] 0.0
    %24 = vst [vmem:[#allocation4] sm:$0xff] -inf
  $region17: #{_encoder_core.1} parent=0 // pred_fallthru
    _
  %v25 = vld [vmem:[%s1] sm:$0xff]
  %v26 = vld [vmem:[%s2] sm:$0xff]
  %v27 = vld [vmem:[%s2 + $0x8] sm:$0xff]
  %v28 = vld [vmem:[%s2 + $0x10] sm:$0xff]
  %v29 = vld [vmem:[%s2 + $0x18] sm:$0xff]
  %v30 = vld [vmem:[%s2 + $0x20] sm:$0xff]
  %v31 = vld [vmem:[%s2 + $0x28] sm:$0xff]
  %v32 = vld [vmem:[%s2 + $0x30] sm:$0xff]
  %v33 = vld [vmem:[%s2 + $0x38] sm:$0xff]
  %v34 = vld [vmem:[%s2 + $0x40] sm:$0xff]
  %v35 = vld [vmem:[%s2 + $0x48] sm:$0xff]
  %v36 = vld [vmem:[%s2 + $0x50] sm:$0xff]
  %v37 = vld [vmem:[%s2 + $0x58] sm:$0xff]
  %v38 = vld [vmem:[%s2 + $0x60] sm:$0xff]
  %v39 = vld [vmem:[%s2 + $0x68] sm:$0xff]
  %v40 = vld [vmem:[%s2 + $0x70] sm:$0xff]
  %v41 = vld [vmem:[%s2 + $0x78] sm:$0xff]
  %v42 = vld [vmem:[%s2 + $0x80] sm:$0xff]
  %v43 = vld [vmem:[%s2 + $0x88] sm:$0xff]
  %v44 = vld [vmem:[%s2 + $0x90] sm:$0xff]
  %v45 = vld [vmem:[%s2 + $0x98] sm:$0xff]
  %v46 = vld [vmem:[%s2 + $0xa0] sm:$0xff]
  %v47 = vld [vmem:[%s2 + $0xa8] sm:$0xff]
  %v48 = vld [vmem:[%s2 + $0xb0] sm:$0xff]
  %v49 = vld [vmem:[%s2 + $0xb8] sm:$0xff]
  %v50 = vld [vmem:[%s2 + $0xc0] sm:$0xff]
  %v51 = vld [vmem:[%s2 + $0xc8] sm:$0xff]
  %v52 = vld [vmem:[%s2 + $0xd0] sm:$0xff]
  %v53 = vld [vmem:[%s2 + $0xd8] sm:$0xff]
  %v54 = vld [vmem:[%s2 + $0xe0] sm:$0xff]
  %v55 = vld [vmem:[%s2 + $0xe8] sm:$0xff]
  %v56 = vld [vmem:[%s2 + $0xf0] sm:$0xff]
  %v57 = vld [vmem:[%s2 + $0xf8] sm:$0xff]
  %v58 = vld [vmem:[%s2 + $0x100] sm:$0xff]
  %v59 = vld [vmem:[%s2 + $0x108] sm:$0xff]
  %v60 = vld [vmem:[%s2 + $0x110] sm:$0xff]
  %v61 = vld [vmem:[%s2 + $0x118] sm:$0xff]
  %v62 = vld [vmem:[%s2 + $0x120] sm:$0xff]
  %v63 = vld [vmem:[%s2 + $0x128] sm:$0xff]
  %v64 = vld [vmem:[%s2 + $0x130] sm:$0xff]
  %v65 = vld [vmem:[%s2 + $0x138] sm:$0xff]
  %v66 = vld [vmem:[%s2 + $0x140] sm:$0xff]
  %v67 = vld [vmem:[%s2 + $0x148] sm:$0xff]
  %v68 = vld [vmem:[%s2 + $0x150] sm:$0xff]
  %v69 = vld [vmem:[%s2 + $0x158] sm:$0xff]
  %v70 = vld [vmem:[%s2 + $0x160] sm:$0xff]
  %v71 = vld [vmem:[%s2 + $0x168] sm:$0xff]
  %v72 = vld [vmem:[%s2 + $0x170] sm:$0xff]
  %v73 = vld [vmem:[%s2 + $0x178] sm:$0xff]
  %v74 = vld [vmem:[%s2 + $0x180] sm:$0xff]
  %v75 = vld [vmem:[%s2 + $0x188] sm:$0xff]
  %v76 = vld [vmem:[%s2 + $0x190] sm:$0xff]
  %v77 = vld [vmem:[%s2 + $0x198] sm:$0xff]
  %v78 = vld [vmem:[%s2 + $0x1a0] sm:$0xff]
  %v79 = vld [vmem:[%s2 + $0x1a8] sm:$0xff]
  %v80 = vld [vmem:[%s2 + $0x1b0] sm:$0xff]
  %v81 = vld [vmem:[%s2 + $0x1b8] sm:$0xff]
  %v82 = vld [vmem:[%s2 + $0x1c0] sm:$0xff]
  %v83 = vld [vmem:[%s2 + $0x1c8] sm:$0xff]
  %v84 = vld [vmem:[%s2 + $0x1d0] sm:$0xff]
  %v85 = vld [vmem:[%s2 + $0x1d8] sm:$0xff]
  %v86 = vld [vmem:[%s2 + $0x1e0] sm:$0xff]
  %v87 = vld [vmem:[%s2 + $0x1e8] sm:$0xff]
  %v88 = vld [vmem:[%s2 + $0x1f0] sm:$0xff]
  %v89 = vld [vmem:[%s2 + $0x1f8] sm:$0xff]
  %s90 = smul.u32 0, 8
  %v91 = vld [vmem:[#allocation2] sm:$0xff]
  %v92 = vld [vmem:[#allocation3] sm:$0xff]
  %v93 = vld [vmem:[#allocation4] sm:$0xff]
  %v94 = vld [vmem:[%s0] sm:$0xff]
  %v95 = vld [vmem:[%s0 + $0x8] sm:$0xff]
  %v96 = vld [vmem:[%s0 + $0x10] sm:$0xff]
  %v97 = vld [vmem:[%s0 + $0x18] sm:$0xff]
  %98 = vmatprep.subr.mxu0 %v27
  %99 = vmatpush1.msra.mxu0 %v26
  %100 = vmatprep.subr.mxu0 %v31
  %101 = vmatpush1.msra.mxu0 %v30
  %102 = vmatprep.subr.mxu0 %v35
  %103 = vmatpush1.msra.mxu0 %v34
  %104 = vmatprep.subr.mxu0 %v39
  %105 = vmatpush1.msra.mxu0 %v38
  %106 = vmatprep.subr.mxu0 %v43
  %107 = vmatpush1.msra.mxu0 %v42
  %108 = vmatprep.subr.mxu0 %v47
  %109 = vmatpush1.msra.mxu0 %v46
  %110 = vmatprep.subr.mxu0 %v51
  %111 = vmatpush1.msra.mxu0 %v50
  %112 = vmatprep.subr.mxu0 %v55
  %113 = vmatpush1.msra.mxu0 %v54
  %114 = vmatprep.subr.mxu0 %v59
  %115 = vmatpush1.msra.mxu0 %v58
  %116 = vmatprep.subr.mxu0 %v63
  %117 = vmatpush1.msra.mxu0 %v62
  %118 = vmatprep.subr.mxu0 %v67
  %119 = vmatpush1.msra.mxu0 %v66
  %120 = vmatprep.subr.mxu0 %v71
  %121 = vmatpush1.msra.mxu0 %v70
  %122 = vmatprep.subr.mxu0 %v75
  %123 = vmatpush1.msra.mxu0 %v74
  %124 = vmatprep.subr.mxu0 %v79
  %125 = vmatpush1.msra.mxu0 %v78
  %126 = vmatprep.subr.mxu0 %v83
  %127 = vmatpush1.msra.mxu0 %v82
  %128 = vmatprep.subr.mxu0 %v87
  %129 = vmatpush1.msra.mxu0 %v86
  %130 = vmatprep.subr.mxu0 0.0
  %131 = vmatpush1.msra.mxu0 0.0
  %132 = vmatprep.subr.mxu0 0.0
  %133 = vmatpush1.msra.mxu0 0.0
  %134 = vmatprep.subr.mxu0 0.0
  %135 = vmatpush1.msra.mxu0 0.0
  %136 = vmatprep.subr.mxu0 0.0
  %137 = vmatpush1.msra.mxu0 0.0
  %138 = vmatprep.subr.mxu0 0.0
  %139 = vmatpush1.msra.mxu0 0.0
  %140 = vmatprep.subr.mxu0 0.0
  %141 = vmatpush1.msra.mxu0 0.0
  %142 = vmatprep.subr.mxu0 0.0
  %143 = vmatpush1.msra.mxu0 0.0
  %144 = vmatprep.subr.mxu0 0.0
  %145 = vmatpush1.msra.mxu0 0.0
  %146 = vmatprep.subr.mxu0 0.0
  %147 = vmatpush1.msra.mxu0 0.0
  %148 = vmatprep.subr.mxu0 0.0
  %149 = vmatpush1.msra.mxu0 0.0
  %150 = vmatprep.subr.mxu0 0.0
  %151 = vmatpush1.msra.mxu0 0.0
  %152 = vmatprep.subr.mxu0 0.0
  %153 = vmatpush1.msra.mxu0 0.0
  %154 = vmatprep.subr.mxu0 0.0
  %155 = vmatpush1.msra.mxu0 0.0
  %156 = vmatprep.subr.mxu0 0.0
  %157 = vmatpush1.msra.mxu0 0.0
  %158 = vmatprep.subr.mxu0 0.0
  %159 = vmatpush1.msra.mxu0 0.0
  %160 = vmatprep.subr.mxu0 0.0
  %161 = vmatpush1.msra.mxu0 0.0
  %162 = vmatprep.mubr.f32.mxu0 0.0
  %163 = vmatmul.mubr.f32.gmra.mrb[0].mxu0 %v91
  %v164 = vpop.f32.mrb[0].mxu0
  %v165 = vadd.f32 0.0, %v164
  %v166 = vpop.f32.mrb[0].mxu0
  %v167 = vadd.f32 0.0, %v166
  %168 = vdwg.mxu0
  %169 = vmatprep.subr.mxu0 %v29
  %170 = vmatpush1.msra.mxu0 %v28
  %171 = vmatprep.subr.mxu0 %v33
  %172 = vmatpush1.msra.mxu0 %v32
  %173 = vmatprep.subr.mxu0 %v37
  %174 = vmatpush1.msra.mxu0 %v36
  %175 = vmatprep.subr.mxu0 %v41
  %176 = vmatpush1.msra.mxu0 %v40
  %177 = vmatprep.subr.mxu0 %v45
  %178 = vmatpush1.msra.mxu0 %v44
  %179 = vmatprep.subr.mxu0 %v49
  %180 = vmatpush1.msra.mxu0 %v48
  %181 = vmatprep.subr.mxu0 %v53
  %182 = vmatpush1.msra.mxu0 %v52
  %183 = vmatprep.subr.mxu0 %v57
  %184 = vmatpush1.msra.mxu0 %v56
  %185 = vmatprep.subr.mxu0 %v61
  %186 = vmatpush1.msra.mxu0 %v60
  %187 = vmatprep.subr.mxu0 %v65
  %188 = vmatpush1.msra.mxu0 %v64
  %189 = vmatprep.subr.mxu0 %v69
  %190 = vmatpush1.msra.mxu0 %v68
  %191 = vmatprep.subr.mxu0 %v73
  %192 = vmatpush1.msra.mxu0 %v72
  %193 = vmatprep.subr.mxu0 %v77
  %194 = vmatpush1.msra.mxu0 %v76
  %195 = vmatprep.subr.mxu0 %v81
  %196 = vmatpush1.msra.mxu0 %v80
  %197 = vmatprep.subr.mxu0 %v85
  %198 = vmatpush1.msra.mxu0 %v84
  %199 = vmatprep.subr.mxu0 %v89
  %200 = vmatpush1.msra.mxu0 %v88
  %201 = vmatprep.subr.mxu0 0.0
  %202 = vmatpush1.msra.mxu0 0.0
  %203 = vmatprep.subr.mxu0 0.0
  %204 = vmatpush1.msra.mxu0 0.0
  %205 = vmatprep.subr.mxu0 0.0
  %206 = vmatpush1.msra.mxu0 0.0
  %207 = vmatprep.subr.mxu0 0.0
  %208 = vmatpush1.msra.mxu0 0.0
  %209 = vmatprep.subr.mxu0 0.0
  %210 = vmatpush1.msra.mxu0 0.0
  %211 = vmatprep.subr.mxu0 0.0
  %212 = vmatpush1.msra.mxu0 0.0
  %213 = vmatprep.subr.mxu0 0.0
  %214 = vmatpush1.msra.mxu0 0.0
  %215 = vmatprep.subr.mxu0 0.0
  %216 = vmatpush1.msra.mxu0 0.0
  %217 = vmatprep.subr.mxu0 0.0
  %218 = vmatpush1.msra.mxu0 0.0
  %219 = vmatprep.subr.mxu0 0.0
  %220 = vmatpush1.msra.mxu0 0.0
  %221 = vmatprep.subr.mxu0 0.0
  %222 = vmatpush1.msra.mxu0 0.0
  %223 = vmatprep.subr.mxu0 0.0
  %224 = vmatpush1.msra.mxu0 0.0
  %225 = vmatprep.subr.mxu0 0.0
  %226 = vmatpush1.msra.mxu0 0.0
  %227 = vmatprep.subr.mxu0 0.0
  %228 = vmatpush1.msra.mxu0 0.0
  %229 = vmatprep.subr.mxu0 0.0
  %230 = vmatpush1.msra.mxu0 0.0
  %231 = vmatprep.subr.mxu0 0.0
  %232 = vmatpush1.msra.mxu0 0.0
  %233 = vmatprep.mubr.f32.mxu0 0.0
  %234 = vmatmul.mubr.f32.gmra.mrb[0].mxu0 %v91
  %v235 = vpop.f32.mrb[0].mxu0
  %v236 = vadd.f32 0.0, %v235
  %v237 = vpop.f32.mrb[0].mxu0
  %v238 = vadd.f32 0.0, %v237
  %239 = vdwg.mxu0
  %v240 = vadd.f32 %v94, %v165
  %v241 = vadd.f32 %v95, %v167
  %v242 = vadd.f32 %v96, %v236
  %v243 = vadd.f32 %v97, %v238
  %v244 = vxor.u32 %v240, 2147483648
  %v245 = vmul.f32 %v244, 1.442695
  %v246 = vpow.pop %v245
  %v247 = vadd.f32 %v246, 1.0
  %v248 = vrcp.pop %v247
  %v249 = vmul.f32 1.0, %v248
  %v250 = vxor.u32 %v241, 2147483648
  %v251 = vmul.f32 %v250, 1.442695
  %v252 = vpow.pop %v251
  %v253 = vadd.f32 %v252, 1.0
  %v254 = vrcp.pop %v253
  %v255 = vmul.f32 1.0, %v254
  %v256 = vtanh.pop %v242
  %v257 = vxor.u32 %v243, 2147483648
  %v258 = vmul.f32 %v257, 1.442695
  %v259 = vpow.pop %v258
  %v260 = vadd.f32 %v259, 1.0
  %v261 = vrcp.pop %v260
  %v262 = vmul.f32 1.0, %v261
  %v263 = vmul.f32 %v255, %v92
  %v264 = vmul.f32 %v249, %v256
  %v265 = vadd.f32 %v263, %v264
  %v266 = vtanh.pop %v265
  %v267 = vmul.f32 %v262, %v266
  %v268 = vstv %s90
  %vm269 = vcmp.lt.s32.totalorder %v268, %v25
  %v270 = vsel %vm269, 1, 0
  %271 = vset.pattern.permute.xlu0 0
  %272 = vperm.xlu0 %271, %v270
  %v273 = vpop.permute.xlu0 %272
  %vm274 = vcmp.eq.s32.totalorder %v273, 1
  %v275 = vsel %vm274, %v267, %v91
  %v276 = vsel %vm274, %v265, %v92
  %v277 = vsel %vm274, %v267, -inf
  %278 = vst [vmem:[%s3] sm:$0xff] %v277
  %v279 = vmax.f32 %v93, %v267
  %v280 = vsel %vm274, %v279, %v93
  %s281 = scalar_lea.vmem %s0, 32
  %v282 = vld [vmem:[%s281] sm:$0xff]
  %v283 = vld [vmem:[%s281 + $0x8] sm:$0xff]
  %v284 = vld [vmem:[%s281 + $0x10] sm:$0xff]
  %v285 = vld [vmem:[%s281 + $0x18] sm:$0xff]
  %286 = vmatprep.subr.mxu0 %v27
  %287 = vmatpush1.msra.mxu0 %v26
  %288 = vmatprep.subr.mxu0 %v31
  %289 = vmatpush1.msra.mxu0 %v30
  %290 = vmatprep.subr.mxu0 %v35
  %291 = vmatpush1.msra.mxu0 %v34
  %292 = vmatprep.subr.mxu0 %v39
  %293 = vmatpush1.msra.mxu0 %v38
  %294 = vmatprep.subr.mxu0 %v43
  %295 = vmatpush1.msra.mxu0 %v42
  %296 = vmatprep.subr.mxu0 %v47
  %297 = vmatpush1.msra.mxu0 %v46
  %298 = vmatprep.subr.mxu0 %v51
  %299 = vmatpush1.msra.mxu0 %v50
  %300 = vmatprep.subr.mxu0 %v55
  %301 = vmatpush1.msra.mxu0 %v54
  %302 = vmatprep.subr.mxu0 %v59
  %303 = vmatpush1.msra.mxu0 %v58
  %304 = vmatprep.subr.mxu0 %v63
  %305 = vmatpush1.msra.mxu0 %v62
  %306 = vmatprep.subr.mxu0 %v67
  %307 = vmatpush1.msra.mxu0 %v66
  %308 = vmatprep.subr.mxu0 %v71
  %309 = vmatpush1.msra.mxu0 %v70
  %310 = vmatprep.subr.mxu0 %v75
  %311 = vmatpush1.msra.mxu0 %v74
  %312 = vmatprep.subr.mxu0 %v79
  %313 = vmatpush1.msra.mxu0 %v78
  %314 = vmatprep.subr.mxu0 %v83
  %315 = vmatpush1.msra.mxu0 %v82
  %316 = vmatprep.subr.mxu0 %v87
  %317 = vmatpush1.msra.mxu0 %v86
  %318 = vmatprep.subr.mxu0 0.0
  %319 = vmatpush1.msra.mxu0 0.0
  %320 = vmatprep.subr.mxu0 0.0
  %321 = vmatpush1.msra.mxu0 0.0
  %322 = vmatprep.subr.mxu0 0.0
  %323 = vmatpush1.msra.mxu0 0.0
  %324 = vmatprep.subr.mxu0 0.0
  %325 = vmatpush1.msra.mxu0 0.0
  %326 = vmatprep.subr.mxu0 0.0
  %327 = vmatpush1.msra.mxu0 0.0
  %328 = vmatprep.subr.mxu0 0.0
  %329 = vmatpush1.msra.mxu0 0.0
  %330 = vmatprep.subr.mxu0 0.0
  %331 = vmatpush1.msra.mxu0 0.0
  %332 = vmatprep.subr.mxu0 0.0
  %333 = vmatpush1.msra.mxu0 0.0
  %334 = vmatprep.subr.mxu0 0.0
  %335 = vmatpush1.msra.mxu0 0.0
  %336 = vmatprep.subr.mxu0 0.0
  %337 = vmatpush1.msra.mxu0 0.0
  %338 = vmatprep.subr.mxu0 0.0
  %339 = vmatpush1.msra.mxu0 0.0
  %340 = vmatprep.subr.mxu0 0.0
  %341 = vmatpush1.msra.mxu0 0.0
  %342 = vmatprep.subr.mxu0 0.0
  %343 = vmatpush1.msra.mxu0 0.0
  %344 = vmatprep.subr.mxu0 0.0
  %345 = vmatpush1.msra.mxu0 0.0
  %346 = vmatprep.subr.mxu0 0.0
  %347 = vmatpush1.msra.mxu0 0.0
  %348 = vmatprep.subr.mxu0 0.0
  %349 = vmatpush1.msra.mxu0 0.0
  %350 = vmatprep.mubr.f32.mxu0 0.0
  %351 = vmatmul.mubr.f32.gmra.mrb[0].mxu0 %v275
  %v352 = vpop.f32.mrb[0].mxu0
  %v353 = vadd.f32 0.0, %v352
  %v354 = vpop.f32.mrb[0].mxu0
  %v355 = vadd.f32 0.0, %v354
  %356 = vdwg.mxu0
  %357 = vmatprep.subr.mxu0 %v29
  %358 = vmatpush1.msra.mxu0 %v28
  %359 = vmatprep.subr.mxu0 %v33
  %360 = vmatpush1.msra.mxu0 %v32
  %361 = vmatprep.subr.mxu0 %v37
  %362 = vmatpush1.msra.mxu0 %v36
  %363 = vmatprep.subr.mxu0 %v41
  %364 = vmatpush1.msra.mxu0 %v40
  %365 = vmatprep.subr.mxu0 %v45
  %366 = vmatpush1.msra.mxu0 %v44
  %367 = vmatprep.subr.mxu0 %v49
  %368 = vmatpush1.msra.mxu0 %v48
  %369 = vmatprep.subr.mxu0 %v53
  %370 = vmatpush1.msra.mxu0 %v52
  %371 = vmatprep.subr.mxu0 %v57
  %372 = vmatpush1.msra.mxu0 %v56
  %373 = vmatprep.subr.mxu0 %v61
  %374 = vmatpush1.msra.mxu0 %v60
  %375 = vmatprep.subr.mxu0 %v65
  %376 = vmatpush1.msra.mxu0 %v64
  %377 = vmatprep.subr.mxu0 %v69
  %378 = vmatpush1.msra.mxu0 %v68
  %379 = vmatprep.subr.mxu0 %v73
  %380 = vmatpush1.msra.mxu0 %v72
  %381 = vmatprep.subr.mxu0 %v77
  %382 = vmatpush1.msra.mxu0 %v76
  %383 = vmatprep.subr.mxu0 %v81
  %384 = vmatpush1.msra.mxu0 %v80
  %385 = vmatprep.subr.mxu0 %v85
  %386 = vmatpush1.msra.mxu0 %v84
  %387 = vmatprep.subr.mxu0 %v89
  %388 = vmatpush1.msra.mxu0 %v88
  %389 = vmatprep.subr.mxu0 0.0
  %390 = vmatpush1.msra.mxu0 0.0
  %391 = vmatprep.subr.mxu0 0.0
  %392 = vmatpush1.msra.mxu0 0.0
  %393 = vmatprep.subr.mxu0 0.0
  %394 = vmatpush1.msra.mxu0 0.0
  %395 = vmatprep.subr.mxu0 0.0
  %396 = vmatpush1.msra.mxu0 0.0
  %397 = vmatprep.subr.mxu0 0.0
  %398 = vmatpush1.msra.mxu0 0.0
  %399 = vmatprep.subr.mxu0 0.0
  %400 = vmatpush1.msra.mxu0 0.0
  %401 = vmatprep.subr.mxu0 0.0
  %402 = vmatpush1.msra.mxu0 0.0
  %403 = vmatprep.subr.mxu0 0.0
  %404 = vmatpush1.msra.mxu0 0.0
  %405 = vmatprep.subr.mxu0 0.0
  %406 = vmatpush1.msra.mxu0 0.0
  %407 = vmatprep.subr.mxu0 0.0
  %408 = vmatpush1.msra.mxu0 0.0
  %409 = vmatprep.subr.mxu0 0.0
  %410 = vmatpush1.msra.mxu0 0.0
  %411 = vmatprep.subr.mxu0 0.0
  %412 = vmatpush1.msra.mxu0 0.0
  %413 = vmatprep.subr.mxu0 0.0
  %414 = vmatpush1.msra.mxu0 0.0
  %415 = vmatprep.subr.mxu0 0.0
  %416 = vmatpush1.msra.mxu0 0.0
  %417 = vmatprep.subr.mxu0 0.0
  %418 = vmatpush1.msra.mxu0 0.0
  %419 = vmatprep.subr.mxu0 0.0
  %420 = vmatpush1.msra.mxu0 0.0
  %421 = vmatprep.mubr.f32.mxu0 0.0
  %422 = vmatmul.mubr.f32.gmra.mrb[0].mxu0 %v275
  %v423 = vpop.f32.mrb[0].mxu0
  %v424 = vadd.f32 0.0, %v423
  %v425 = vpop.f32.mrb[0].mxu0
  %v426 = vadd.f32 0.0, %v425
  %427 = vdwg.mxu0
  %v428 = vadd.f32 %v282, %v353
  %v429 = vadd.f32 %v283, %v355
  %v430 = vadd.f32 %v284, %v424
  %v431 = vadd.f32 %v285, %v426
  %v432 = vxor.u32 %v428, 2147483648
  %v433 = vmul.f32 %v432, 1.442695
  %v434 = vpow.pop %v433
  %v435 = vadd.f32 %v434, 1.0
  %v436 = vrcp.pop %v435
  %v437 = vmul.f32 1.0, %v436
  %v438 = vxor.u32 %v429, 2147483648
  %v439 = vmul.f32 %v438, 1.442695
  %v440 = vpow.pop %v439
  %v441 = vadd.f32 %v440, 1.0
  %v442 = vrcp.pop %v441
  %v443 = vmul.f32 1.0, %v442
  %v444 = vtanh.pop %v430
  %v445 = vxor.u32 %v431, 2147483648
  %v446 = vmul.f32 %v445, 1.442695
  %v447 = vpow.pop %v446
  %v448 = vadd.f32 %v447, 1.0
  %v449 = vrcp.pop %v448
  %v450 = vmul.f32 1.0, %v449
  %v451 = vmul.f32 %v443, %v276
  %v452 = vmul.f32 %v437, %v444
  %v453 = vadd.f32 %v451, %v452
  %v454 = vtanh.pop %v453
  %v455 = vmul.f32 %v450, %v454
  %s456 = sadd.s32 %s90, 1
  %v457 = vstv %s456
  %vm458 = vcmp.lt.s32.totalorder %v457, %v25
  %v459 = vsel %vm458, 1, 0
  %460 = vset.pattern.permute.xlu0 0
  %461 = vperm.xlu0 %460, %v459
  %v462 = vpop.permute.xlu0 %461
  %vm463 = vcmp.eq.s32.totalorder %v462, 1
  %v464 = vsel %vm463, %v455, %v275
  %v465 = vsel %vm463, %v453, %v276
  %v466 = vsel %vm463, %v455, -inf
  %s467 = scalar_lea.vmem %s3, 8
  %468 = vst [vmem:[%s467] sm:$0xff] %v466
  %v469 = vmax.f32 %v280, %v455
  %v470 = vsel %vm463, %v469, %v280
  %s471 = scalar_lea.vmem %s0, 64
  %v472 = vld [vmem:[%s471] sm:$0xff]
  %v473 = vld [vmem:[%s471 + $0x8] sm:$0xff]
  %v474 = vld [vmem:[%s471 + $0x10] sm:$0xff]
  %v475 = vld [vmem:[%s471 + $0x18] sm:$0xff]
  %476 = vmatprep.subr.mxu0 %v27
  %477 = vmatpush1.msra.mxu0 %v26
  %478 = vmatprep.subr.mxu0 %v31
  %479 = vmatpush1.msra.mxu0 %v30
  %480 = vmatprep.subr.mxu0 %v35
  %481 = vmatpush1.msra.mxu0 %v34
  %482 = vmatprep.subr.mxu0 %v39
  %483 = vmatpush1.msra.mxu0 %v38
  %484 = vmatprep.subr.mxu0 %v43
  %485 = vmatpush1.msra.mxu0 %v42
  %486 = vmatprep.subr.mxu0 %v47
  %487 = vmatpush1.msra.mxu0 %v46
  %488 = vmatprep.subr.mxu0 %v51
  %489 = vmatpush1.msra.mxu0 %v50
  %490 = vmatprep.subr.mxu0 %v55
  %491 = vmatpush1.msra.mxu0 %v54
  %492 = vmatprep.subr.mxu0 %v59
  %493 = vmatpush1.msra.mxu0 %v58
  %494 = vmatprep.subr.mxu0 %v63
  %495 = vmatpush1.msra.mxu0 %v62
  %496 = vmatprep.subr.mxu0 %v67
  %497 = vmatpush1.msra.mxu0 %v66
  %498 = vmatprep.subr.mxu0 %v71
  %499 = vmatpush1.msra.mxu0 %v70
  %500 = vmatprep.subr.mxu0 %v75
  %501 = vmatpush1.msra.mxu0 %v74
  %502 = vmatprep.subr.mxu0 %v79
  %503 = vmatpush1.msra.mxu0 %v78
  %504 = vmatprep.subr.mxu0 %v83
  %505 = vmatpush1.msra.mxu0 %v82
  %506 = vmatprep.subr.mxu0 %v87
  %507 = vmatpush1.msra.mxu0 %v86
  %508 = vmatprep.subr.mxu0 0.0
  %509 = vmatpush1.msra.mxu0 0.0
  %510 = vmatprep.subr.mxu0 0.0
  %511 = vmatpush1.msra.mxu0 0.0
  %512 = vmatprep.subr.mxu0 0.0
  %513 = vmatpush1.msra.mxu0 0.0
  %514 = vmatprep.subr.mxu0 0.0
  %515 = vmatpush1.msra.mxu0 0.0
  %516 = vmatprep.subr.mxu0 0.0
  %517 = vmatpush1.msra.mxu0 0.0
  %518 = vmatprep.subr.mxu0 0.0
  %519 = vmatpush1.msra.mxu0 0.0
  %520 = vmatprep.subr.mxu0 0.0
  %521 = vmatpush1.msra.mxu0 0.0
  %522 = vmatprep.subr.mxu0 0.0
  %523 = vmatpush1.msra.mxu0 0.0
  %524 = vmatprep.subr.mxu0 0.0
  %525 = vmatpush1.msra.mxu0 0.0
  %526 = vmatprep.subr.mxu0 0.0
  %527 = vmatpush1.msra.mxu0 0.0
  %528 = vmatprep.subr.mxu0 0.0
  %529 = vmatpush1.msra.mxu0 0.0
  %530 = vmatprep.subr.mxu0 0.0
  %531 = vmatpush1.msra.mxu0 0.0
  %532 = vmatprep.subr.mxu0 0.0
  %533 = vmatpush1.msra.mxu0 0.0
  %534 = vmatprep.subr.mxu0 0.0
  %535 = vmatpush1.msra.mxu0 0.0
  %536 = vmatprep.subr.mxu0 0.0
  %537 = vmatpush1.msra.mxu0 0.0
  %538 = vmatprep.subr.mxu0 0.0
  %539 = vmatpush1.msra.mxu0 0.0
  %540 = vmatprep.mubr.f32.mxu0 0.0
  %541 = vmatmul.mubr.f32.gmra.mrb[0].mxu0 %v464
  %v542 = vpop.f32.mrb[0].mxu0
  %v543 = vadd.f32 0.0, %v542
  %v544 = vpop.f32.mrb[0].mxu0
  %v545 = vadd.f32 0.0, %v544
  %546 = vdwg.mxu0
  %547 = vmatprep.subr.mxu0 %v29
  %548 = vmatpush1.msra.mxu0 %v28
  %549 = vmatprep.subr.mxu0 %v33
  %550 = vmatpush1.msra.mxu0 %v32
  %551 = vmatprep.subr.mxu0 %v37
  %552 = vmatpush1.msra.mxu0 %v36
  %553 = vmatprep.subr.mxu0 %v41
  %554 = vmatpush1.msra.mxu0 %v40
  %555 = vmatprep.subr.mxu0 %v45
  %556 = vmatpush1.msra.mxu0 %v44
  %557 = vmatprep.subr.mxu0 %v49
  %558 = vmatpush1.msra.mxu0 %v48
  %559 = vmatprep.subr.mxu0 %v53
  %560 = vmatpush1.msra.mxu0 %v52
  %561 = vmatprep.subr.mxu0 %v57
  %562 = vmatpush1.msra.mxu0 %v56
  %563 = vmatprep.subr.mxu0 %v61
  %564 = vmatpush1.msra.mxu0 %v60
  %565 = vmatprep.subr.mxu0 %v65
  %566 = vmatpush1.msra.mxu0 %v64
  %567 = vmatprep.subr.mxu0 %v69
  %568 = vmatpush1.msra.mxu0 %v68
  %569 = vmatprep.subr.mxu0 %v73
  %570 = vmatpush1.msra.mxu0 %v72
  %571 = vmatprep.subr.mxu0 %v77
  %572 = vmatpush1.msra.mxu0 %v76
  %573 = vmatprep.subr.mxu0 %v81
  %574 = vmatpush1.msra.mxu0 %v80
  %575 = vmatprep.subr.mxu0 %v85
  %576 = vmatpush1.msra.mxu0 %v84
  %577 = vmatprep.subr.mxu0 %v89
  %578 = vmatpush1.msra.mxu0 %v88
  %579 = vmatprep.subr.mxu0 0.0
  %580 = vmatpush1.msra.mxu0 0.0
  %581 = vmatprep.subr.mxu0 0.0
  %582 = vmatpush1.msra.mxu0 0.0
  %583 = vmatprep.subr.mxu0 0.0
  %584 = vmatpush1.msra.mxu0 0.0
  %585 = vmatprep.subr.mxu0 0.0
  %586 = vmatpush1.msra.mxu0 0.0
  %587 = vmatprep.subr.mxu0 0.0
  %588 = vmatpush1.msra.mxu0 0.0
  %589 = vmatprep.subr.mxu0 0.0
  %590 = vmatpush1.msra.mxu0 0.0
  %591 = vmatprep.subr.mxu0 0.0
  %592 = vmatpush1.msra.mxu0 0.0
  %593 = vmatprep.subr.mxu0 0.0
  %594 = vmatpush1.msra.mxu0 0.0
  %595 = vmatprep.subr.mxu0 0.0
  %596 = vmatpush1.msra.mxu0 0.0
  %597 = vmatprep.subr.mxu0 0.0
  %598 = vmatpush1.msra.mxu0 0.0
  %599 = vmatprep.subr.mxu0 0.0
  %600 = vmatpush1.msra.mxu0 0.0
  %601 = vmatprep.subr.mxu0 0.0
  %602 = vmatpush1.msra.mxu0 0.0
  %603 = vmatprep.subr.mxu0 0.0
  %604 = vmatpush1.msra.mxu0 0.0
  %605 = vmatprep.subr.mxu0 0.0
  %606 = vmatpush1.msra.mxu0 0.0
  %607 = vmatprep.subr.mxu0 0.0
  %608 = vmatpush1.msra.mxu0 0.0
  %609 = vmatprep.subr.mxu0 0.0
  %610 = vmatpush1.msra.mxu0 0.0
  %611 = vmatprep.mubr.f32.mxu0 0.0
  %612 = vmatmul.mubr.f32.gmra.mrb[0].mxu0 %v464
  %v613 = vpop.f32.mrb[0].mxu0
  %v614 = vadd.f32 0.0, %v613
  %v615 = vpop.f32.mrb[0].mxu0
  %v616 = vadd.f32 0.0, %v615
  %617 = vdwg.mxu0
  %v618 = vadd.f32 %v472, %v543
  %v619 = vadd.f32 %v473, %v545
  %v620 = vadd.f32 %v474, %v614
  %v621 = vadd.f32 %v475, %v616
  %v622 = vxor.u32 %v618, 2147483648
  %v623 = vmul.f32 %v622, 1.442695
  %v624 = vpow.pop %v623
  %v625 = vadd.f32 %v624, 1.0
  %v626 = vrcp.pop %v625
  %v627 = vmul.f32 1.0, %v626
  %v628 = vxor.u32 %v619, 2147483648
  %v629 = vmul.f32 %v628, 1.442695
  %v630 = vpow.pop %v629
  %v631 = vadd.f32 %v630, 1.0
  %v632 = vrcp.pop %v631
  %v633 = vmul.f32 1.0, %v632
  %v634 = vtanh.pop %v620
  %v635 = vxor.u32 %v621, 2147483648
  %v636 = vmul.f32 %v635, 1.442695
  %v637 = vpow.pop %v636
  %v638 = vadd.f32 %v637, 1.0
  %v639 = vrcp.pop %v638
  %v640 = vmul.f32 1.0, %v639
  %v641 = vmul.f32 %v633, %v465
  %v642 = vmul.f32 %v627, %v634
  %v643 = vadd.f32 %v641, %v642
  %v644 = vtanh.pop %v643
  %v645 = vmul.f32 %v640, %v644
  %s646 = sadd.s32 %s90, 2
  %v647 = vstv %s646
  %vm648 = vcmp.lt.s32.totalorder %v647, %v25
  %v649 = vsel %vm648, 1, 0
  %650 = vset.pattern.permute.xlu0 0
  %651 = vperm.xlu0 %650, %v649
  %v652 = vpop.permute.xlu0 %651
  %vm653 = vcmp.eq.s32.totalorder %v652, 1
  %v654 = vsel %vm653, %v645, %v464
  %v655 = vsel %vm653, %v643, %v465
  %v656 = vsel %vm653, %v645, -inf
  %s657 = scalar_lea.vmem %s3, 16
  %658 = vst [vmem:[%s657] sm:$0xff] %v656
  %v659 = vmax.f32 %v470, %v645
  %v660 = vsel %vm653, %v659, %v470
  %s661 = scalar_lea.vmem %s0, 96
  %v662 = vld [vmem:[%s661] sm:$0xff]
  %v663 = vld [vmem:[%s661 + $0x8] sm:$0xff]
  %v664 = vld [vmem:[%s661 + $0x10] sm:$0xff]
  %v665 = vld [vmem:[%s661 + $0x18] sm:$0xff]
  %666 = vmatprep.subr.mxu0 %v27
  %667 = vmatpush1.msra.mxu0 %v26
  %668 = vmatprep.subr.mxu0 %v31
  %669 = vmatpush1.msra.mxu0 %v30
  %670 = vmatprep.subr.mxu0 %v35
  %671 = vmatpush1.msra.mxu0 %v34
  %672 = vmatprep.subr.mxu0 %v39
  %673 = vmatpush1.msra.mxu0 %v38
  %674 = vmatprep.subr.mxu0 %v43
  %675 = vmatpush1.msra.mxu0 %v42
  %676 = vmatprep.subr.mxu0 %v47
  %677 = vmatpush1.msra.mxu0 %v46
  %678 = vmatprep.subr.mxu0 %v51
  %679 = vmatpush1.msra.mxu0 %v50
  %680 = vmatprep.subr.mxu0 %v55
  %681 = vmatpush1.msra.mxu0 %v54
  %682 = vmatprep.subr.mxu0 %v59
  %683 = vmatpush1.msra.mxu0 %v58
  %684 = vmatprep.subr.mxu0 %v63
  %685 = vmatpush1.msra.mxu0 %v62
  %686 = vmatprep.subr.mxu0 %v67
  %687 = vmatpush1.msra.mxu0 %v66
  %688 = vmatprep.subr.mxu0 %v71
  %689 = vmatpush1.msra.mxu0 %v70
  %690 = vmatprep.subr.mxu0 %v75
  %691 = vmatpush1.msra.mxu0 %v74
  %692 = vmatprep.subr.mxu0 %v79
  %693 = vmatpush1.msra.mxu0 %v78
  %694 = vmatprep.subr.mxu0 %v83
  %695 = vmatpush1.msra.mxu0 %v82
  %696 = vmatprep.subr.mxu0 %v87
  %697 = vmatpush1.msra.mxu0 %v86
  %698 = vmatprep.subr.mxu0 0.0
  %699 = vmatpush1.msra.mxu0 0.0
  %700 = vmatprep.subr.mxu0 0.0
  %701 = vmatpush1.msra.mxu0 0.0
  %702 = vmatprep.subr.mxu0 0.0
  %703 = vmatpush1.msra.mxu0 0.0
  %704 = vmatprep.subr.mxu0 0.0
  %705 = vmatpush1.msra.mxu0 0.0
  %706 = vmatprep.subr.mxu0 0.0
  %707 = vmatpush1.msra.mxu0 0.0
  %708 = vmatprep.subr.mxu0 0.0
  %709 = vmatpush1.msra.mxu0 0.0
  %710 = vmatprep.subr.mxu0 0.0
  %711 = vmatpush1.msra.mxu0 0.0
  %712 = vmatprep.subr.mxu0 0.0
  %713 = vmatpush1.msra.mxu0 0.0
  %714 = vmatprep.subr.mxu0 0.0
  %715 = vmatpush1.msra.mxu0 0.0
  %716 = vmatprep.subr.mxu0 0.0
  %717 = vmatpush1.msra.mxu0 0.0
  %718 = vmatprep.subr.mxu0 0.0
  %719 = vmatpush1.msra.mxu0 0.0
  %720 = vmatprep.subr.mxu0 0.0
  %721 = vmatpush1.msra.mxu0 0.0
  %722 = vmatprep.subr.mxu0 0.0
  %723 = vmatpush1.msra.mxu0 0.0
  %724 = vmatprep.subr.mxu0 0.0
  %725 = vmatpush1.msra.mxu0 0.0
  %726 = vmatprep.subr.mxu0 0.0
  %727 = vmatpush1.msra.mxu0 0.0
  %728 = vmatprep.subr.mxu0 0.0
  %729 = vmatpush1.msra.mxu0 0.0
  %730 = vmatprep.mubr.f32.mxu0 0.0
  %731 = vmatmul.mubr.f32.gmra.mrb[0].mxu0 %v654
  %v732 = vpop.f32.mrb[0].mxu0
  %v733 = vadd.f32 0.0, %v732
  %v734 = vpop.f32.mrb[0].mxu0
  %v735 = vadd.f32 0.0, %v734
  %736 = vdwg.mxu0
  %737 = vmatprep.subr.mxu0 %v29
  %738 = vmatpush1.msra.mxu0 %v28
  %739 = vmatprep.subr.mxu0 %v33
  %740 = vmatpush1.msra.mxu0 %v32
  %741 = vmatprep.subr.mxu0 %v37
  %742 = vmatpush1.msra.mxu0 %v36
  %743 = vmatprep.subr.mxu0 %v41
  %744 = vmatpush1.msra.mxu0 %v40
  %745 = vmatprep.subr.mxu0 %v45
  %746 = vmatpush1.msra.mxu0 %v44
  %747 = vmatprep.subr.mxu0 %v49
  %748 = vmatpush1.msra.mxu0 %v48
  %749 = vmatprep.subr.mxu0 %v53
  %750 = vmatpush1.msra.mxu0 %v52
  %751 = vmatprep.subr.mxu0 %v57
  %752 = vmatpush1.msra.mxu0 %v56
  %753 = vmatprep.subr.mxu0 %v61
  %754 = vmatpush1.msra.mxu0 %v60
  %755 = vmatprep.subr.mxu0 %v65
  %756 = vmatpush1.msra.mxu0 %v64
  %757 = vmatprep.subr.mxu0 %v69
  %758 = vmatpush1.msra.mxu0 %v68
  %759 = vmatprep.subr.mxu0 %v73
  %760 = vmatpush1.msra.mxu0 %v72
  %761 = vmatprep.subr.mxu0 %v77
  %762 = vmatpush1.msra.mxu0 %v76
  %763 = vmatprep.subr.mxu0 %v81
  %764 = vmatpush1.msra.mxu0 %v80
  %765 = vmatprep.subr.mxu0 %v85
  %766 = vmatpush1.msra.mxu0 %v84
  %767 = vmatprep.subr.mxu0 %v89
  %768 = vmatpush1.msra.mxu0 %v88
  %769 = vmatprep.subr.mxu0 0.0
  %770 = vmatpush1.msra.mxu0 0.0
  %771 = vmatprep.subr.mxu0 0.0
  %772 = vmatpush1.msra.mxu0 0.0
  %773 = vmatprep.subr.mxu0 0.0
  %774 = vmatpush1.msra.mxu0 0.0
  %775 = vmatprep.subr.mxu0 0.0
  %776 = vmatpush1.msra.mxu0 0.0
  %777 = vmatprep.subr.mxu0 0.0
  %778 = vmatpush1.msra.mxu0 0.0
  %779 = vmatprep.subr.mxu0 0.0
  %780 = vmatpush1.msra.mxu0 0.0
  %781 = vmatprep.subr.mxu0 0.0
  %782 = vmatpush1.msra.mxu0 0.0
  %783 = vmatprep.subr.mxu0 0.0
  %784 = vmatpush1.msra.mxu0 0.0
  %785 = vmatprep.subr.mxu0 0.0
  %786 = vmatpush1.msra.mxu0 0.0
  %787 = vmatprep.subr.mxu0 0.0
  %788 = vmatpush1.msra.mxu0 0.0
  %789 = vmatprep.subr.mxu0 0.0
  %790 = vmatpush1.msra.mxu0 0.0
  %791 = vmatprep.subr.mxu0 0.0
  %792 = vmatpush1.msra.mxu0 0.0
  %793 = vmatprep.subr.mxu0 0.0
  %794 = vmatpush1.msra.mxu0 0.0
  %795 = vmatprep.subr.mxu0 0.0
  %796 = vmatpush1.msra.mxu0 0.0
  %797 = vmatprep.subr.mxu0 0.0
  %798 = vmatpush1.msra.mxu0 0.0
  %799 = vmatprep.subr.mxu0 0.0
  %800 = vmatpush1.msra.mxu0 0.0
  %801 = vmatprep.mubr.f32.mxu0 0.0
  %802 = vmatmul.mubr.f32.gmra.mrb[0].mxu0 %v654
  %v803 = vpop.f32.mrb[0].mxu0
  %v804 = vadd.f32 0.0, %v803
  %v805 = vpop.f32.mrb[0].mxu0
  %v806 = vadd.f32 0.0, %v805
  %807 = vdwg.mxu0
  %v808 = vadd.f32 %v662, %v733
  %v809 = vadd.f32 %v663, %v735
  %v810 = vadd.f32 %v664, %v804
  %v811 = vadd.f32 %v665, %v806
  %v812 = vxor.u32 %v808, 2147483648
  %v813 = vmul.f32 %v812, 1.442695
  %v814 = vpow.pop %v813
  %v815 = vadd.f32 %v814, 1.0
  %v816 = vrcp.pop %v815
  %v817 = vmul.f32 1.0, %v816
  %v818 = vxor.u32 %v809, 2147483648
  %v819 = vmul.f32 %v818, 1.442695
  %v820 = vpow.pop %v819
  %v821 = vadd.f32 %v820, 1.0
  %v822 = vrcp.pop %v821
  %v823 = vmul.f32 1.0, %v822
  %v824 = vtanh.pop %v810
  %v825 = vxor.u32 %v811, 2147483648
  %v826 = vmul.f32 %v825, 1.442695
  %v827 = vpow.pop %v826
  %v828 = vadd.f32 %v827, 1.0
  %v829 = vrcp.pop %v828
  %v830 = vmul.f32 1.0, %v829
  %v831 = vmul.f32 %v823, %v655
  %v832 = vmul.f32 %v817, %v824
  %v833 = vadd.f32 %v831, %v832
  %v834 = vtanh.pop %v833
  %v835 = vmul.f32 %v830, %v834
  %s836 = sadd.s32 %s90, 3
  %v837 = vstv %s836
  %vm838 = vcmp.lt.s32.totalorder %v837, %v25
  %v839 = vsel %vm838, 1, 0
  %840 = vset.pattern.permute.xlu0 0
  %841 = vperm.xlu0 %840, %v839
  %v842 = vpop.permute.xlu0 %841
  %vm843 = vcmp.eq.s32.totalorder %v842, 1
  %v844 = vsel %vm843, %v835, %v654
  %v845 = vsel %vm843, %v833, %v655
  %v846 = vsel %vm843, %v835, -inf
  %s847 = scalar_lea.vmem %s3, 24
  %848 = vst [vmem:[%s847] sm:$0xff] %v846
  %v849 = vmax.f32 %v660, %v835
  %v850 = vsel %vm843, %v849, %v660
  %s851 = scalar_lea.vmem %s0, 128
  %v852 = vld [vmem:[%s851] sm:$0xff]
  %v853 = vld [vmem:[%s851 + $0x8] sm:$0xff]
  %v854 = vld [vmem:[%s851 + $0x10] sm:$0xff]
  %v855 = vld [vmem:[%s851 + $0x18] sm:$0xff]
  %856 = vmatprep.subr.mxu0 %v27
  %857 = vmatpush1.msra.mxu0 %v26
  %858 = vmatprep.subr.mxu0 %v31
  %859 = vmatpush1.msra.mxu0 %v30
  %860 = vmatprep.subr.mxu0 %v35
  %861 = vmatpush1.msra.mxu0 %v34
  %862 = vmatprep.subr.mxu0 %v39
  %863 = vmatpush1.msra.mxu0 %v38
  %864 = vmatprep.subr.mxu0 %v43
  %865 = vmatpush1.msra.mxu0 %v42
  %866 = vmatprep.subr.mxu0 %v47
  %867 = vmatpush1.msra.mxu0 %v46
  %868 = vmatprep.subr.mxu0 %v51
  %869 = vmatpush1.msra.mxu0 %v50
  %870 = vmatprep.subr.mxu0 %v55
  %871 = vmatpush1.msra.mxu0 %v54
  %872 = vmatprep.subr.mxu0 %v59
  %873 = vmatpush1.msra.mxu0 %v58
  %874 = vmatprep.subr.mxu0 %v63
  %875 = vmatpush1.msra.mxu0 %v62
  %876 = vmatprep.subr.mxu0 %v67
  %877 = vmatpush1.msra.mxu0 %v66
  %878 = vmatprep.subr.mxu0 %v71
  %879 = vmatpush1.msra.mxu0 %v70
  %880 = vmatprep.subr.mxu0 %v75
  %881 = vmatpush1.msra.mxu0 %v74
  %882 = vmatprep.subr.mxu0 %v79
  %883 = vmatpush1.msra.mxu0 %v78
  %884 = vmatprep.subr.mxu0 %v83
  %885 = vmatpush1.msra.mxu0 %v82
  %886 = vmatprep.subr.mxu0 %v87
  %887 = vmatpush1.msra.mxu0 %v86
  %888 = vmatprep.subr.mxu0 0.0
  %889 = vmatpush1.msra.mxu0 0.0
  %890 = vmatprep.subr.mxu0 0.0
  %891 = vmatpush1.msra.mxu0 0.0
  %892 = vmatprep.subr.mxu0 0.0
  %893 = vmatpush1.msra.mxu0 0.0
  %894 = vmatprep.subr.mxu0 0.0
  %895 = vmatpush1.msra.mxu0 0.0
  %896 = vmatprep.subr.mxu0 0.0
  %897 = vmatpush1.msra.mxu0 0.0
  %898 = vmatprep.subr.mxu0 0.0
  %899 = vmatpush1.msra.mxu0 0.0
  %900 = vmatprep.subr.mxu0 0.0
  %901 = vmatpush1.msra.mxu0 0.0
  %902 = vmatprep.subr.mxu0 0.0
  %903 = vmatpush1.msra.mxu0 0.0
  %904 = vmatprep.subr.mxu0 0.0
  %905 = vmatpush1.msra.mxu0 0.0
  %906 = vmatprep.subr.mxu0 0.0
  %907 = vmatpush1.msra.mxu0 0.0
  %908 = vmatprep.subr.mxu0 0.0
  %909 = vmatpush1.msra.mxu0 0.0
  %910 = vmatprep.subr.mxu0 0.0
  %911 = vmatpush1.msra.mxu0 0.0
  %912 = vmatprep.subr.mxu0 0.0
  %913 = vmatpush1.msra.mxu0 0.0
  %914 = vmatprep.subr.mxu0 0.0
  %915 = vmatpush1.msra.mxu0 0.0
  %916 = vmatprep.subr.mxu0 0.0
  %917 = vmatpush1.msra.mxu0 0.0
  %918 = vmatprep.subr.mxu0 0.0
  %919 = vmatpush1.msra.mxu0 0.0
  %920 = vmatprep.mubr.f32.mxu0 0.0
  %921 = vmatmul.mubr.f32.gmra.mrb[0].mxu0 %v844
  %v922 = vpop.f32.mrb[0].mxu0
  %v923 = vadd.f32 0.0, %v922
  %v924 = vpop.f32.mrb[0].mxu0
  %v925 = vadd.f32 0.0, %v924
  %926 = vdwg.mxu0
  %927 = vmatprep.subr.mxu0 %v29
  %928 = vmatpush1.msra.mxu0 %v28
  %929 = vmatprep.subr.mxu0 %v33
  %930 = vmatpush1.msra.mxu0 %v32
  %931 = vmatprep.subr.mxu0 %v37
  %932 = vmatpush1.msra.mxu0 %v36
  %933 = vmatprep.subr.mxu0 %v41
  %934 = vmatpush1.msra.mxu0 %v40
  %935 = vmatprep.subr.mxu0 %v45
  %936 = vmatpush1.msra.mxu0 %v44
  %937 = vmatprep.subr.mxu0 %v49
  %938 = vmatpush1.msra.mxu0 %v48
  %939 = vmatprep.subr.mxu0 %v53
  %940 = vmatpush1.msra.mxu0 %v52
  %941 = vmatprep.subr.mxu0 %v57
  %942 = vmatpush1.msra.mxu0 %v56
  %943 = vmatprep.subr.mxu0 %v61
  %944 = vmatpush1.msra.mxu0 %v60
  %945 = vmatprep.subr.mxu0 %v65
  %946 = vmatpush1.msra.mxu0 %v64
  %947 = vmatprep.subr.mxu0 %v69
  %948 = vmatpush1.msra.mxu0 %v68
  %949 = vmatprep.subr.mxu0 %v73
  %950 = vmatpush1.msra.mxu0 %v72
  %951 = vmatprep.subr.mxu0 %v77
  %952 = vmatpush1.msra.mxu0 %v76
  %953 = vmatprep.subr.mxu0 %v81
  %954 = vmatpush1.msra.mxu0 %v80
  %955 = vmatprep.subr.mxu0 %v85
  %956 = vmatpush1.msra.mxu0 %v84
  %957 = vmatprep.subr.mxu0 %v89
  %958 = vmatpush1.msra.mxu0 %v88
  %959 = vmatprep.subr.mxu0 0.0
  %960 = vmatpush1.msra.mxu0 0.0
  %961 = vmatprep.subr.mxu0 0.0
  %962 = vmatpush1.msra.mxu0 0.0
  %963 = vmatprep.subr.mxu0 0.0
  %964 = vmatpush1.msra.mxu0 0.0
  %965 = vmatprep.subr.mxu0 0.0
  %966 = vmatpush1.msra.mxu0 0.0
  %967 = vmatprep.subr.mxu0 0.0
  %968 = vmatpush1.msra.mxu0 0.0
  %969 = vmatprep.subr.mxu0 0.0
  %970 = vmatpush1.msra.mxu0 0.0
  %971 = vmatprep.subr.mxu0 0.0
  %972 = vmatpush1.msra.mxu0 0.0
  %973 = vmatprep.subr.mxu0 0.0
  %974 = vmatpush1.msra.mxu0 0.0
  %975 = vmatprep.subr.mxu0 0.0
  %976 = vmatpush1.msra.mxu0 0.0
  %977 = vmatprep.subr.mxu0 0.0
  %978 = vmatpush1.msra.mxu0 0.0
  %979 = vmatprep.subr.mxu0 0.0
  %980 = vmatpush1.msra.mxu0 0.0
  %981 = vmatprep.subr.mxu0 0.0
  %982 = vmatpush1.msra.mxu0 0.0
  %983 = vmatprep.subr.mxu0 0.0
  %984 = vmatpush1.msra.mxu0 0.0
  %985 = vmatprep.subr.mxu0 0.0
  %986 = vmatpush1.msra.mxu0 0.0
  %987 = vmatprep.subr.mxu0 0.0
  %988 = vmatpush1.msra.mxu0 0.0
  %989 = vmatprep.subr.mxu0 0.0
  %990 = vmatpush1.msra.mxu0 0.0
  %991 = vmatprep.mubr.f32.mxu0 0.0
  %992 = vmatmul.mubr.f32.gmra.mrb[0].mxu0 %v844
  %v993 = vpop.f32.mrb[0].mxu0
  %v994 = vadd.f32 0.0, %v993
  %v995 = vpop.f32.mrb[0].mxu0
  %v996 = vadd.f32 0.0, %v995
  %997 = vdwg.mxu0
  %v998 = vadd.f32 %v852, %v923
  %v999 = vadd.f32 %v853, %v925
  %v1000 = vadd.f32 %v854, %v994
  %v1001 = vadd.f32 %v855, %v996
  %v1002 = vxor.u32 %v998, 2147483648
  %v1003 = vmul.f32 %v1002, 1.442695
  %v1004 = vpow.pop %v1003
  %v1005 = vadd.f32 %v1004, 1.0
  %v1006 = vrcp.pop %v1005
  %v1007 = vmul.f32 1.0, %v1006
  %v1008 = vxor.u32 %v999, 2147483648
  %v1009 = vmul.f32 %v1008, 1.442695
  %v1010 = vpow.pop %v1009
  %v1011 = vadd.f32 %v1010, 1.0
  %v1012 = vrcp.pop %v1011
  %v1013 = vmul.f32 1.0, %v1012
  %v1014 = vtanh.pop %v1000
  %v1015 = vxor.u32 %v1001, 2147483648
  %v1016 = vmul.f32 %v1015, 1.442695
  %v1017 = vpow.pop %v1016
  %v1018 = vadd.f32 %v1017, 1.0
  %v1019 = vrcp.pop %v1018
  %v1020 = vmul.f32 1.0, %v1019
  %v1021 = vmul.f32 %v1013, %v845
  %v1022 = vmul.f32 %v1007, %v1014
  %v1023 = vadd.f32 %v1021, %v1022
  %v1024 = vtanh.pop %v1023
  %v1025 = vmul.f32 %v1020, %v1024
  %s1026 = sadd.s32 %s90, 4
  %v1027 = vstv %s1026
  %vm1028 = vcmp.lt.s32.totalorder %v1027, %v25
  %v1029 = vsel %vm1028, 1, 0
  %1030 = vset.pattern.permute.xlu0 0
  %1031 = vperm.xlu0 %1030, %v1029
  %v1032 = vpop.permute.xlu0 %1031
  %vm1033 = vcmp.eq.s32.totalorder %v1032, 1
  %v1034 = vsel %vm1033, %v1025, %v844
  %v1035 = vsel %vm1033, %v1023, %v845
  %v1036 = vsel %vm1033, %v1025, -inf
  %s1037 = scalar_lea.vmem %s3, 32
  %1038 = vst [vmem:[%s1037] sm:$0xff] %v1036
  %v1039 = vmax.f32 %v850, %v1025
  %v1040 = vsel %vm1033, %v1039, %v850
  %s1041 = scalar_lea.vmem %s0, 160
  %v1042 = vld [vmem:[%s1041] sm:$0xff]
  %v1043 = vld [vmem:[%s1041 + $0x8] sm:$0xff]
  %v1044 = vld [vmem:[%s1041 + $0x10] sm:$0xff]
  %v1045 = vld [vmem:[%s1041 + $0x18] sm:$0xff]
  %1046 = vmatprep.subr.mxu0 %v27
  %1047 = vmatpush1.msra.mxu0 %v26
  %1048 = vmatprep.subr.mxu0 %v31
  %1049 = vmatpush1.msra.mxu0 %v30
  %1050 = vmatprep.subr.mxu0 %v35
  %1051 = vmatpush1.msra.mxu0 %v34
  %1052 = vmatprep.subr.mxu0 %v39
  %1053 = vmatpush1.msra.mxu0 %v38
  %1054 = vmatprep.subr.mxu0 %v43
  %1055 = vmatpush1.msra.mxu0 %v42
  %1056 = vmatprep.subr.mxu0 %v47
  %1057 = vmatpush1.msra.mxu0 %v46
  %1058 = vmatprep.subr.mxu0 %v51
  %1059 = vmatpush1.msra.mxu0 %v50
  %1060 = vmatprep.subr.mxu0 %v55
  %1061 = vmatpush1.msra.mxu0 %v54
  %1062 = vmatprep.subr.mxu0 %v59
  %1063 = vmatpush1.msra.mxu0 %v58
  %1064 = vmatprep.subr.mxu0 %v63
  %1065 = vmatpush1.msra.mxu0 %v62
  %1066 = vmatprep.subr.mxu0 %v67
  %1067 = vmatpush1.msra.mxu0 %v66
  %1068 = vmatprep.subr.mxu0 %v71
  %1069 = vmatpush1.msra.mxu0 %v70
  %1070 = vmatprep.subr.mxu0 %v75
  %1071 = vmatpush1.msra.mxu0 %v74
  %1072 = vmatprep.subr.mxu0 %v79
  %1073 = vmatpush1.msra.mxu0 %v78
  %1074 = vmatprep.subr.mxu0 %v83
  %1075 = vmatpush1.msra.mxu0 %v82
  %1076 = vmatprep.subr.mxu0 %v87
  %1077 = vmatpush1.msra.mxu0 %v86
  %1078 = vmatprep.subr.mxu0 0.0
  %1079 = vmatpush1.msra.mxu0 0.0
  %1080 = vmatprep.subr.mxu0 0.0
  %1081 = vmatpush1.msra.mxu0 0.0
  %1082 = vmatprep.subr.mxu0 0.0
  %1083 = vmatpush1.msra.mxu0 0.0
  %1084 = vmatprep.subr.mxu0 0.0
  %1085 = vmatpush1.msra.mxu0 0.0
  %1086 = vmatprep.subr.mxu0 0.0
  %1087 = vmatpush1.msra.mxu0 0.0
  %1088 = vmatprep.subr.mxu0 0.0
  %1089 = vmatpush1.msra.mxu0 0.0
  %1090 = vmatprep.subr.mxu0 0.0
  %1091 = vmatpush1.msra.mxu0 0.0
  %1092 = vmatprep.subr.mxu0 0.0
  %1093 = vmatpush1.msra.mxu0 0.0
  %1094 = vmatprep.subr.mxu0 0.0
  %1095 = vmatpush1.msra.mxu0 0.0
  %1096 = vmatprep.subr.mxu0 0.0
  %1097 = vmatpush1.msra.mxu0 0.0
  %1098 = vmatprep.subr.mxu0 0.0
  %1099 = vmatpush1.msra.mxu0 0.0
  %1100 = vmatprep.subr.mxu0 0.0
  %1101 = vmatpush1.msra.mxu0 0.0
  %1102 = vmatprep.subr.mxu0 0.0
  %1103 = vmatpush1.msra.mxu0 0.0
  %1104 = vmatprep.subr.mxu0 0.0
  %1105 = vmatpush1.msra.mxu0 0.0
  %1106 = vmatprep.subr.mxu0 0.0
  %1107 = vmatpush1.msra.mxu0 0.0
  %1108 = vmatprep.subr.mxu0 0.0
  %1109 = vmatpush1.msra.mxu0 0.0
  %1110 = vmatprep.mubr.f32.mxu0 0.0
  %1111 = vmatmul.mubr.f32.gmra.mrb[0].mxu0 %v1034
  %v1112 = vpop.f32.mrb[0].mxu0
  %v1113 = vadd.f32 0.0, %v1112
  %v1114 = vpop.f32.mrb[0].mxu0
  %v1115 = vadd.f32 0.0, %v1114
  %1116 = vdwg.mxu0
  %1117 = vmatprep.subr.mxu0 %v29
  %1118 = vmatpush1.msra.mxu0 %v28
  %1119 = vmatprep.subr.mxu0 %v33
  %1120 = vmatpush1.msra.mxu0 %v32
  %1121 = vmatprep.subr.mxu0 %v37
  %1122 = vmatpush1.msra.mxu0 %v36
  %1123 = vmatprep.subr.mxu0 %v41
  %1124 = vmatpush1.msra.mxu0 %v40
  %1125 = vmatprep.subr.mxu0 %v45
  %1126 = vmatpush1.msra.mxu0 %v44
  %1127 = vmatprep.subr.mxu0 %v49
  %1128 = vmatpush1.msra.mxu0 %v48
  %1129 = vmatprep.subr.mxu0 %v53
  %1130 = vmatpush1.msra.mxu0 %v52
  %1131 = vmatprep.subr.mxu0 %v57
  %1132 = vmatpush1.msra.mxu0 %v56
  %1133 = vmatprep.subr.mxu0 %v61
  %1134 = vmatpush1.msra.mxu0 %v60
  %1135 = vmatprep.subr.mxu0 %v65
  %1136 = vmatpush1.msra.mxu0 %v64
  %1137 = vmatprep.subr.mxu0 %v69
  %1138 = vmatpush1.msra.mxu0 %v68
  %1139 = vmatprep.subr.mxu0 %v73
  %1140 = vmatpush1.msra.mxu0 %v72
  %1141 = vmatprep.subr.mxu0 %v77
  %1142 = vmatpush1.msra.mxu0 %v76
  %1143 = vmatprep.subr.mxu0 %v81
  %1144 = vmatpush1.msra.mxu0 %v80
  %1145 = vmatprep.subr.mxu0 %v85
  %1146 = vmatpush1.msra.mxu0 %v84
  %1147 = vmatprep.subr.mxu0 %v89
  %1148 = vmatpush1.msra.mxu0 %v88
  %1149 = vmatprep.subr.mxu0 0.0
  %1150 = vmatpush1.msra.mxu0 0.0
  %1151 = vmatprep.subr.mxu0 0.0
  %1152 = vmatpush1.msra.mxu0 0.0
  %1153 = vmatprep.subr.mxu0 0.0
  %1154 = vmatpush1.msra.mxu0 0.0
  %1155 = vmatprep.subr.mxu0 0.0
  %1156 = vmatpush1.msra.mxu0 0.0
  %1157 = vmatprep.subr.mxu0 0.0
  %1158 = vmatpush1.msra.mxu0 0.0
  %1159 = vmatprep.subr.mxu0 0.0
  %1160 = vmatpush1.msra.mxu0 0.0
  %1161 = vmatprep.subr.mxu0 0.0
  %1162 = vmatpush1.msra.mxu0 0.0
  %1163 = vmatprep.subr.mxu0 0.0
  %1164 = vmatpush1.msra.mxu0 0.0
  %1165 = vmatprep.subr.mxu0 0.0
  %1166 = vmatpush1.msra.mxu0 0.0
  %1167 = vmatprep.subr.mxu0 0.0
  %1168 = vmatpush1.msra.mxu0 0.0
  %1169 = vmatprep.subr.mxu0 0.0
  %1170 = vmatpush1.msra.mxu0 0.0
  %1171 = vmatprep.subr.mxu0 0.0
  %1172 = vmatpush1.msra.mxu0 0.0
  %1173 = vmatprep.subr.mxu0 0.0
  %1174 = vmatpush1.msra.mxu0 0.0
  %1175 = vmatprep.subr.mxu0 0.0
  %1176 = vmatpush1.msra.mxu0 0.0
  %1177 = vmatprep.subr.mxu0 0.0
  %1178 = vmatpush1.msra.mxu0 0.0
  %1179 = vmatprep.subr.mxu0 0.0
  %1180 = vmatpush1.msra.mxu0 0.0
  %1181 = vmatprep.mubr.f32.mxu0 0.0
  %1182 = vmatmul.mubr.f32.gmra.mrb[0].mxu0 %v1034
  %v1183 = vpop.f32.mrb[0].mxu0
  %v1184 = vadd.f32 0.0, %v1183
  %v1185 = vpop.f32.mrb[0].mxu0
  %v1186 = vadd.f32 0.0, %v1185
  %1187 = vdwg.mxu0
  %v1188 = vadd.f32 %v1042, %v1113
  %v1189 = vadd.f32 %v1043, %v1115
  %v1190 = vadd.f32 %v1044, %v1184
  %v1191 = vadd.f32 %v1045, %v1186
  %v1192 = vxor.u32 %v1188, 2147483648
  %v1193 = vmul.f32 %v1192, 1.442695
  %v1194 = vpow.pop %v1193
  %v1195 = vadd.f32 %v1194, 1.0
  %v1196 = vrcp.pop %v1195
  %v1197 = vmul.f32 1.0, %v1196
  %v1198 = vxor.u32 %v1189, 2147483648
  %v1199 = vmul.f32 %v1198, 1.442695
  %v1200 = vpow.pop %v1199
  %v1201 = vadd.f32 %v1200, 1.0
  %v1202 = vrcp.pop %v1201
  %v1203 = vmul.f32 1.0, %v1202
  %v1204 = vtanh.pop %v1190
  %v1205 = vxor.u32 %v1191, 2147483648
  %v1206 = vmul.f32 %v1205, 1.442695
  %v1207 = vpow.pop %v1206
  %v1208 = vadd.f32 %v1207, 1.0
  %v1209 = vrcp.pop %v1208
  %v1210 = vmul.f32 1.0, %v1209
  %v1211 = vmul.f32 %v1203, %v1035
  %v1212 = vmul.f32 %v1197, %v1204
  %v1213 = vadd.f32 %v1211, %v1212
  %v1214 = vtanh.pop %v1213
  %v1215 = vmul.f32 %v1210, %v1214
  %s1216 = sadd.s32 %s90, 5
  %v1217 = vstv %s1216
  %vm1218 = vcmp.lt.s32.totalorder %v1217, %v25
  %v1219 = vsel %vm1218, 1, 0
  %1220 = vset.pattern.permute.xlu0 0
  %1221 = vperm.xlu0 %1220, %v1219
  %v1222 = vpop.permute.xlu0 %1221
  %vm1223 = vcmp.eq.s32.totalorder %v1222, 1
  %v1224 = vsel %vm1223, %v1215, %v1034
  %v1225 = vsel %vm1223, %v1213, %v1035
  %v1226 = vsel %vm1223, %v1215, -inf
  %s1227 = scalar_lea.vmem %s3, 40
  %1228 = vst [vmem:[%s1227] sm:$0xff] %v1226
  %v1229 = vmax.f32 %v1040, %v1215
  %v1230 = vsel %vm1223, %v1229, %v1040
  %s1231 = scalar_lea.vmem %s0, 192
  %v1232 = vld [vmem:[%s1231] sm:$0xff]
  %v1233 = vld [vmem:[%s1231 + $0x8] sm:$0xff]
  %v1234 = vld [vmem:[%s1231 + $0x10] sm:$0xff]
  %v1235 = vld [vmem:[%s1231 + $0x18] sm:$0xff]
  %1236 = vmatprep.subr.mxu0 %v27
  %1237 = vmatpush1.msra.mxu0 %v26
  %1238 = vmatprep.subr.mxu0 %v31
  %1239 = vmatpush1.msra.mxu0 %v30
  %1240 = vmatprep.subr.mxu0 %v35
  %1241 = vmatpush1.msra.mxu0 %v34
  %1242 = vmatprep.subr.mxu0 %v39
  %1243 = vmatpush1.msra.mxu0 %v38
  %1244 = vmatprep.subr.mxu0 %v43
  %1245 = vmatpush1.msra.mxu0 %v42
  %1246 = vmatprep.subr.mxu0 %v47
  %1247 = vmatpush1.msra.mxu0 %v46
  %1248 = vmatprep.subr.mxu0 %v51
  %1249 = vmatpush1.msra.mxu0 %v50
  %1250 = vmatprep.subr.mxu0 %v55
  %1251 = vmatpush1.msra.mxu0 %v54
  %1252 = vmatprep.subr.mxu0 %v59
  %1253 = vmatpush1.msra.mxu0 %v58
  %1254 = vmatprep.subr.mxu0 %v63
  %1255 = vmatpush1.msra.mxu0 %v62
  %1256 = vmatprep.subr.mxu0 %v67
  %1257 = vmatpush1.msra.mxu0 %v66
  %1258 = vmatprep.subr.mxu0 %v71
  %1259 = vmatpush1.msra.mxu0 %v70
  %1260 = vmatprep.subr.mxu0 %v75
  %1261 = vmatpush1.msra.mxu0 %v74
  %1262 = vmatprep.subr.mxu0 %v79
  %1263 = vmatpush1.msra.mxu0 %v78
  %1264 = vmatprep.subr.mxu0 %v83
  %1265 = vmatpush1.msra.mxu0 %v82
  %1266 = vmatprep.subr.mxu0 %v87
  %1267 = vmatpush1.msra.mxu0 %v86
  %1268 = vmatprep.subr.mxu0 0.0
  %1269 = vmatpush1.msra.mxu0 0.0
  %1270 = vmatprep.subr.mxu0 0.0
  %1271 = vmatpush1.msra.mxu0 0.0
  %1272 = vmatprep.subr.mxu0 0.0
  %1273 = vmatpush1.msra.mxu0 0.0
  %1274 = vmatprep.subr.mxu0 0.0
  %1275 = vmatpush1.msra.mxu0 0.0
  %1276 = vmatprep.subr.mxu0 0.0
  %1277 = vmatpush1.msra.mxu0 0.0
  %1278 = vmatprep.subr.mxu0 0.0
  %1279 = vmatpush1.msra.mxu0 0.0
  %1280 = vmatprep.subr.mxu0 0.0
  %1281 = vmatpush1.msra.mxu0 0.0
  %1282 = vmatprep.subr.mxu0 0.0
  %1283 = vmatpush1.msra.mxu0 0.0
  %1284 = vmatprep.subr.mxu0 0.0
  %1285 = vmatpush1.msra.mxu0 0.0
  %1286 = vmatprep.subr.mxu0 0.0
  %1287 = vmatpush1.msra.mxu0 0.0
  %1288 = vmatprep.subr.mxu0 0.0
  %1289 = vmatpush1.msra.mxu0 0.0
  %1290 = vmatprep.subr.mxu0 0.0
  %1291 = vmatpush1.msra.mxu0 0.0
  %1292 = vmatprep.subr.mxu0 0.0
  %1293 = vmatpush1.msra.mxu0 0.0
  %1294 = vmatprep.subr.mxu0 0.0
  %1295 = vmatpush1.msra.mxu0 0.0
  %1296 = vmatprep.subr.mxu0 0.0
  %1297 = vmatpush1.msra.mxu0 0.0
  %1298 = vmatprep.subr.mxu0 0.0
  %1299 = vmatpush1.msra.mxu0 0.0
  %1300 = vmatprep.mubr.f32.mxu0 0.0
  %1301 = vmatmul.mubr.f32.gmra.mrb[0].mxu0 %v1224
  %v1302 = vpop.f32.mrb[0].mxu0
  %v1303 = vadd.f32 0.0, %v1302
  %v1304 = vpop.f32.mrb[0].mxu0
  %v1305 = vadd.f32 0.0, %v1304
  %1306 = vdwg.mxu0
  %1307 = vmatprep.subr.mxu0 %v29
  %1308 = vmatpush1.msra.mxu0 %v28
  %1309 = vmatprep.subr.mxu0 %v33
  %1310 = vmatpush1.msra.mxu0 %v32
  %1311 = vmatprep.subr.mxu0 %v37
  %1312 = vmatpush1.msra.mxu0 %v36
  %1313 = vmatprep.subr.mxu0 %v41
  %1314 = vmatpush1.msra.mxu0 %v40
  %1315 = vmatprep.subr.mxu0 %v45
  %1316 = vmatpush1.msra.mxu0 %v44
  %1317 = vmatprep.subr.mxu0 %v49
  %1318 = vmatpush1.msra.mxu0 %v48
  %1319 = vmatprep.subr.mxu0 %v53
  %1320 = vmatpush1.msra.mxu0 %v52
  %1321 = vmatprep.subr.mxu0 %v57
  %1322 = vmatpush1.msra.mxu0 %v56
  %1323 = vmatprep.subr.mxu0 %v61
  %1324 = vmatpush1.msra.mxu0 %v60
  %1325 = vmatprep.subr.mxu0 %v65
  %1326 = vmatpush1.msra.mxu0 %v64
  %1327 = vmatprep.subr.mxu0 %v69
  %1328 = vmatpush1.msra.mxu0 %v68
  %1329 = vmatprep.subr.mxu0 %v73
  %1330 = vmatpush1.msra.mxu0 %v72
  %1331 = vmatprep.subr.mxu0 %v77
  %1332 = vmatpush1.msra.mxu0 %v76
  %1333 = vmatprep.subr.mxu0 %v81
  %1334 = vmatpush1.msra.mxu0 %v80
  %1335 = vmatprep.subr.mxu0 %v85
  %1336 = vmatpush1.msra.mxu0 %v84
  %1337 = vmatprep.subr.mxu0 %v89
  %1338 = vmatpush1.msra.mxu0 %v88
  %1339 = vmatprep.subr.mxu0 0.0
  %1340 = vmatpush1.msra.mxu0 0.0
  %1341 = vmatprep.subr.mxu0 0.0
  %1342 = vmatpush1.msra.mxu0 0.0
  %1343 = vmatprep.subr.mxu0 0.0
  %1344 = vmatpush1.msra.mxu0 0.0
  %1345 = vmatprep.subr.mxu0 0.0
  %1346 = vmatpush1.msra.mxu0 0.0
  %1347 = vmatprep.subr.mxu0 0.0
  %1348 = vmatpush1.msra.mxu0 0.0
  %1349 = vmatprep.subr.mxu0 0.0
  %1350 = vmatpush1.msra.mxu0 0.0
  %1351 = vmatprep.subr.mxu0 0.0
  %1352 = vmatpush1.msra.mxu0 0.0
  %1353 = vmatprep.subr.mxu0 0.0
  %1354 = vmatpush1.msra.mxu0 0.0
  %1355 = vmatprep.subr.mxu0 0.0
  %1356 = vmatpush1.msra.mxu0 0.0
  %1357 = vmatprep.subr.mxu0 0.0
  %1358 = vmatpush1.msra.mxu0 0.0
  %1359 = vmatprep.subr.mxu0 0.0
  %1360 = vmatpush1.msra.mxu0 0.0
  %1361 = vmatprep.subr.mxu0 0.0
  %1362 = vmatpush1.msra.mxu0 0.0
  %1363 = vmatprep.subr.mxu0 0.0
  %1364 = vmatpush1.msra.mxu0 0.0
  %1365 = vmatprep.subr.mxu0 0.0
  %1366 = vmatpush1.msra.mxu0 0.0
  %1367 = vmatprep.subr.mxu0 0.0
  %1368 = vmatpush1.msra.mxu0 0.0
  %1369 = vmatprep.subr.mxu0 0.0
  %1370 = vmatpush1.msra.mxu0 0.0
  %1371 = vmatprep.mubr.f32.mxu0 0.0
  %1372 = vmatmul.mubr.f32.gmra.mrb[0].mxu0 %v1224
  %v1373 = vpop.f32.mrb[0].mxu0
  %v1374 = vadd.f32 0.0, %v1373
  %v1375 = vpop.f32.mrb[0].mxu0
  %v1376 = vadd.f32 0.0, %v1375
  %1377 = vdwg.mxu0
  %v1378 = vadd.f32 %v1232, %v1303
  %v1379 = vadd.f32 %v1233, %v1305
  %v1380 = vadd.f32 %v1234, %v1374
  %v1381 = vadd.f32 %v1235, %v1376
  %v1382 = vxor.u32 %v1378, 2147483648
  %v1383 = vmul.f32 %v1382, 1.442695
  %v1384 = vpow.pop %v1383
  %v1385 = vadd.f32 %v1384, 1.0
  %v1386 = vrcp.pop %v1385
  %v1387 = vmul.f32 1.0, %v1386
  %v1388 = vxor.u32 %v1379, 2147483648
  %v1389 = vmul.f32 %v1388, 1.442695
  %v1390 = vpow.pop %v1389
  %v1391 = vadd.f32 %v1390, 1.0
  %v1392 = vrcp.pop %v1391
  %v1393 = vmul.f32 1.0, %v1392
  %v1394 = vtanh.pop %v1380
  %v1395 = vxor.u32 %v1381, 2147483648
  %v1396 = vmul.f32 %v1395, 1.442695
  %v1397 = vpow.pop %v1396
  %v1398 = vadd.f32 %v1397, 1.0
  %v1399 = vrcp.pop %v1398
  %v1400 = vmul.f32 1.0, %v1399
  %v1401 = vmul.f32 %v1393, %v1225
  %v1402 = vmul.f32 %v1387, %v1394
  %v1403 = vadd.f32 %v1401, %v1402
  %v1404 = vtanh.pop %v1403
  %v1405 = vmul.f32 %v1400, %v1404
  %s1406 = sadd.s32 %s90, 6
  %v1407 = vstv %s1406
  %vm1408 = vcmp.lt.s32.totalorder %v1407, %v25
  %v1409 = vsel %vm1408, 1, 0
  %1410 = vset.pattern.permute.xlu0 0
  %1411 = vperm.xlu0 %1410, %v1409
  %v1412 = vpop.permute.xlu0 %1411
  %vm1413 = vcmp.eq.s32.totalorder %v1412, 1
  %v1414 = vsel %vm1413, %v1405, %v1224
  %v1415 = vsel %vm1413, %v1403, %v1225
  %v1416 = vsel %vm1413, %v1405, -inf
  %s1417 = scalar_lea.vmem %s3, 48
  %1418 = vst [vmem:[%s1417] sm:$0xff] %v1416
  %v1419 = vmax.f32 %v1230, %v1405
  %v1420 = vsel %vm1413, %v1419, %v1230
  %s1421 = scalar_lea.vmem %s0, 224
  %v1422 = vld [vmem:[%s1421] sm:$0xff]
  %v1423 = vld [vmem:[%s1421 + $0x8] sm:$0xff]
  %v1424 = vld [vmem:[%s1421 + $0x10] sm:$0xff]
  %v1425 = vld [vmem:[%s1421 + $0x18] sm:$0xff]
  %1426 = vmatprep.subr.mxu0 %v27
  %1427 = vmatpush1.msra.mxu0 %v26
  %1428 = vmatprep.subr.mxu0 %v31
  %1429 = vmatpush1.msra.mxu0 %v30
  %1430 = vmatprep.subr.mxu0 %v35
  %1431 = vmatpush1.msra.mxu0 %v34
  %1432 = vmatprep.subr.mxu0 %v39
  %1433 = vmatpush1.msra.mxu0 %v38
  %1434 = vmatprep.subr.mxu0 %v43
  %1435 = vmatpush1.msra.mxu0 %v42
  %1436 = vmatprep.subr.mxu0 %v47
  %1437 = vmatpush1.msra.mxu0 %v46
  %1438 = vmatprep.subr.mxu0 %v51
  %1439 = vmatpush1.msra.mxu0 %v50
  %1440 = vmatprep.subr.mxu0 %v55
  %1441 = vmatpush1.msra.mxu0 %v54
  %1442 = vmatprep.subr.mxu0 %v59
  %1443 = vmatpush1.msra.mxu0 %v58
  %1444 = vmatprep.subr.mxu0 %v63
  %1445 = vmatpush1.msra.mxu0 %v62
  %1446 = vmatprep.subr.mxu0 %v67
  %1447 = vmatpush1.msra.mxu0 %v66
  %1448 = vmatprep.subr.mxu0 %v71
  %1449 = vmatpush1.msra.mxu0 %v70
  %1450 = vmatprep.subr.mxu0 %v75
  %1451 = vmatpush1.msra.mxu0 %v74
  %1452 = vmatprep.subr.mxu0 %v79
  %1453 = vmatpush1.msra.mxu0 %v78
  %1454 = vmatprep.subr.mxu0 %v83
  %1455 = vmatpush1.msra.mxu0 %v82
  %1456 = vmatprep.subr.mxu0 %v87
  %1457 = vmatpush1.msra.mxu0 %v86
  %1458 = vmatprep.subr.mxu0 0.0
  %1459 = vmatpush1.msra.mxu0 0.0
  %1460 = vmatprep.subr.mxu0 0.0
  %1461 = vmatpush1.msra.mxu0 0.0
  %1462 = vmatprep.subr.mxu0 0.0
  %1463 = vmatpush1.msra.mxu0 0.0
  %1464 = vmatprep.subr.mxu0 0.0
  %1465 = vmatpush1.msra.mxu0 0.0
  %1466 = vmatprep.subr.mxu0 0.0
  %1467 = vmatpush1.msra.mxu0 0.0
  %1468 = vmatprep.subr.mxu0 0.0
  %1469 = vmatpush1.msra.mxu0 0.0
  %1470 = vmatprep.subr.mxu0 0.0
  %1471 = vmatpush1.msra.mxu0 0.0
  %1472 = vmatprep.subr.mxu0 0.0
  %1473 = vmatpush1.msra.mxu0 0.0
  %1474 = vmatprep.subr.mxu0 0.0
  %1475 = vmatpush1.msra.mxu0 0.0
  %1476 = vmatprep.subr.mxu0 0.0
  %1477 = vmatpush1.msra.mxu0 0.0
  %1478 = vmatprep.subr.mxu0 0.0
  %1479 = vmatpush1.msra.mxu0 0.0
  %1480 = vmatprep.subr.mxu0 0.0
  %1481 = vmatpush1.msra.mxu0 0.0
  %1482 = vmatprep.subr.mxu0 0.0
  %1483 = vmatpush1.msra.mxu0 0.0
  %1484 = vmatprep.subr.mxu0 0.0
  %1485 = vmatpush1.msra.mxu0 0.0
  %1486 = vmatprep.subr.mxu0 0.0
  %1487 = vmatpush1.msra.mxu0 0.0
  %1488 = vmatprep.subr.mxu0 0.0
  %1489 = vmatpush1.msra.mxu0 0.0
  %1490 = vmatprep.mubr.f32.mxu0 0.0
  %1491 = vmatmul.mubr.f32.gmra.mrb[0].mxu0 %v1414
  %v1492 = vpop.f32.mrb[0].mxu0
  %v1493 = vadd.f32 0.0, %v1492
  %v1494 = vpop.f32.mrb[0].mxu0
  %v1495 = vadd.f32 0.0, %v1494
  %1496 = vdwg.mxu0
  %1497 = vmatprep.subr.mxu0 %v29
  %1498 = vmatpush1.msra.mxu0 %v28
  %1499 = vmatprep.subr.mxu0 %v33
  %1500 = vmatpush1.msra.mxu0 %v32
  %1501 = vmatprep.subr.mxu0 %v37
  %1502 = vmatpush1.msra.mxu0 %v36
  %1503 = vmatprep.subr.mxu0 %v41
  %1504 = vmatpush1.msra.mxu0 %v40
  %1505 = vmatprep.subr.mxu0 %v45
  %1506 = vmatpush1.msra.mxu0 %v44
  %1507 = vmatprep.subr.mxu0 %v49
  %1508 = vmatpush1.msra.mxu0 %v48
  %1509 = vmatprep.subr.mxu0 %v53
  %1510 = vmatpush1.msra.mxu0 %v52
  %1511 = vmatprep.subr.mxu0 %v57
  %1512 = vmatpush1.msra.mxu0 %v56
  %1513 = vmatprep.subr.mxu0 %v61
  %1514 = vmatpush1.msra.mxu0 %v60
  %1515 = vmatprep.subr.mxu0 %v65
  %1516 = vmatpush1.msra.mxu0 %v64
  %1517 = vmatprep.subr.mxu0 %v69
  %1518 = vmatpush1.msra.mxu0 %v68
  %1519 = vmatprep.subr.mxu0 %v73
  %1520 = vmatpush1.msra.mxu0 %v72
  %1521 = vmatprep.subr.mxu0 %v77
  %1522 = vmatpush1.msra.mxu0 %v76
  %1523 = vmatprep.subr.mxu0 %v81
  %1524 = vmatpush1.msra.mxu0 %v80
  %1525 = vmatprep.subr.mxu0 %v85
  %1526 = vmatpush1.msra.mxu0 %v84
  %1527 = vmatprep.subr.mxu0 %v89
  %1528 = vmatpush1.msra.mxu0 %v88
  %1529 = vmatprep.subr.mxu0 0.0
  %1530 = vmatpush1.msra.mxu0 0.0
  %1531 = vmatprep.subr.mxu0 0.0
  %1532 = vmatpush1.msra.mxu0 0.0
  %1533 = vmatprep.subr.mxu0 0.0
  %1534 = vmatpush1.msra.mxu0 0.0
  %1535 = vmatprep.subr.mxu0 0.0
  %1536 = vmatpush1.msra.mxu0 0.0
  %1537 = vmatprep.subr.mxu0 0.0
  %1538 = vmatpush1.msra.mxu0 0.0
  %1539 = vmatprep.subr.mxu0 0.0
  %1540 = vmatpush1.msra.mxu0 0.0
  %1541 = vmatprep.subr.mxu0 0.0
  %1542 = vmatpush1.msra.mxu0 0.0
  %1543 = vmatprep.subr.mxu0 0.0
  %1544 = vmatpush1.msra.mxu0 0.0
  %1545 = vmatprep.subr.mxu0 0.0
  %1546 = vmatpush1.msra.mxu0 0.0
  %1547 = vmatprep.subr.mxu0 0.0
  %1548 = vmatpush1.msra.mxu0 0.0
  %1549 = vmatprep.subr.mxu0 0.0
  %1550 = vmatpush1.msra.mxu0 0.0
  %1551 = vmatprep.subr.mxu0 0.0
  %1552 = vmatpush1.msra.mxu0 0.0
  %1553 = vmatprep.subr.mxu0 0.0
  %1554 = vmatpush1.msra.mxu0 0.0
  %1555 = vmatprep.subr.mxu0 0.0
  %1556 = vmatpush1.msra.mxu0 0.0
  %1557 = vmatprep.subr.mxu0 0.0
  %1558 = vmatpush1.msra.mxu0 0.0
  %1559 = vmatprep.subr.mxu0 0.0
  %1560 = vmatpush1.msra.mxu0 0.0
  %1561 = vmatprep.mubr.f32.mxu0 0.0
  %1562 = vmatmul.mubr.f32.gmra.mrb[0].mxu0 %v1414
  %v1563 = vpop.f32.mrb[0].mxu0
  %v1564 = vadd.f32 0.0, %v1563
  %v1565 = vpop.f32.mrb[0].mxu0
  %v1566 = vadd.f32 0.0, %v1565
  %1567 = vdwg.mxu0
  %v1568 = vadd.f32 %v1422, %v1493
  %v1569 = vadd.f32 %v1423, %v1495
  %v1570 = vadd.f32 %v1424, %v1564
  %v1571 = vadd.f32 %v1425, %v1566
  %v1572 = vxor.u32 %v1568, 2147483648
  %v1573 = vmul.f32 %v1572, 1.442695
  %v1574 = vpow.pop %v1573
  %v1575 = vadd.f32 %v1574, 1.0
  %v1576 = vrcp.pop %v1575
  %v1577 = vmul.f32 1.0, %v1576
  %v1578 = vxor.u32 %v1569, 2147483648
  %v1579 = vmul.f32 %v1578, 1.442695
  %v1580 = vpow.pop %v1579
  %v1581 = vadd.f32 %v1580, 1.0
  %v1582 = vrcp.pop %v1581
  %v1583 = vmul.f32 1.0, %v1582
  %v1584 = vtanh.pop %v1570
  %v1585 = vxor.u32 %v1571, 2147483648
  %v1586 = vmul.f32 %v1585, 1.442695
  %v1587 = vpow.pop %v1586
  %v1588 = vadd.f32 %v1587, 1.0
  %v1589 = vrcp.pop %v1588
  %v1590 = vmul.f32 1.0, %v1589
  %v1591 = vmul.f32 %v1583, %v1415
  %v1592 = vmul.f32 %v1577, %v1584
  %v1593 = vadd.f32 %v1591, %v1592
  %v1594 = vtanh.pop %v1593
  %v1595 = vmul.f32 %v1590, %v1594
  %s1596 = sadd.s32 %s90, 7
  %v1597 = vstv %s1596
  %vm1598 = vcmp.lt.s32.totalorder %v1597, %v25
  %v1599 = vsel %vm1598, 1, 0
  %1600 = vset.pattern.permute.xlu0 0
  %1601 = vperm.xlu0 %1600, %v1599
  %v1602 = vpop.permute.xlu0 %1601
  %vm1603 = vcmp.eq.s32.totalorder %v1602, 1
  %v1604 = vsel %vm1603, %v1595, %v1414
  %v1605 = vsel %vm1603, %v1593, %v1415
  %v1606 = vsel %vm1603, %v1595, -inf
  %s1607 = scalar_lea.vmem %s3, 56
  %1608 = vst [vmem:[%s1607] sm:$0xff] %v1606
  %v1609 = vmax.f32 %v1420, %v1595
  %v1610 = vsel %vm1603, %v1609, %v1420
  %1611 = vst [vmem:[#allocation2] sm:$0xff] %v1604
  %1612 = vst [vmem:[#allocation3] sm:$0xff] %v1605
  %1613 = vst [vmem:[#allocation4] sm:$0xff] %v1610
  // Predicated region
  $region18: #{_encoder_core.1} parent=0 // pred_check
    %p1614 = pneg %p18
  $region19: #{_encoder_core.1} parent=0 // pred_check_branch
    %1616 = sbr.rel (%p1614) target = $region21
  $region20: #{_encoder_core.1} parent=0 // pred_region
    %v1617 = vld [vmem:[#allocation2] sm:$0xff]
    %1618 = vst [vmem:[%s4] sm:$0xff] %v1617
    %v1619 = vld [vmem:[#allocation3] sm:$0xff]
    %1620 = vst [vmem:[%s5] sm:$0xff] %v1619
    %v1621 = vld [vmem:[#allocation4] sm:$0xff]
    %1622 = vst [vmem:[%s6] sm:$0xff] %v1621
  $region21: #{_encoder_core.1} parent=0 // pred_fallthru
    _
  // Predicated region
  $region22: #{_encoder_core.1} parent=0 // pred_check
    _
  $region23: #{_encoder_core.1} parent=0 // pred_check_branch
    %1624 = sbr.rel (0) target = $region25
  $region24: #{_encoder_core.1} parent=0 // pred_region
    _
  $region25: #{_encoder_core.1} parent=0 // pred_fallthru
    _
  // Predicated region
  $region26: #{_encoder_core.1} parent=0 // pred_check
    _
  $region27: #{_encoder_core.1} parent=0 // pred_check_branch
    %1626 = sbr.rel (0) target = $region29
  $region28: #{_encoder_core.1} parent=0 // pred_region
    _
  $region29: #{_encoder_core.1} parent=0 // pred_fallthru
    _
  // Predicated region
  $region30: #{_encoder_core.1} parent=0 // pred_check
    _
  $region31: #{_encoder_core.1} parent=0 // pred_check_branch
    %1628 = sbr.rel (0) target = $region33
  $region32: #{_encoder_core.1} parent=0 // pred_region
    _
  $region33: #{_encoder_core.1} parent=0 // pred_fallthru
    _
  // Predicated region
  $region34: #{_encoder_core.1} parent=0 // pred_check
    _
  $region35: #{_encoder_core.1} parent=0 // pred_check_branch
    %1630 = sbr.rel (0) target = $region37
  $region36: #{_encoder_core.1} parent=0 // pred_region
    _
  $region37: #{_encoder_core.1} parent=0 // pred_fallthru
    _
  // Predicated region
  $region38: #{_encoder_core.1} parent=0 // pred_check
    _
  $region39: #{_encoder_core.1} parent=0 // pred_check_branch
    %1632 = sbr.rel (0) target = $region41
  $region40: #{_encoder_core.1} parent=0 // pred_region
    _
  $region41: #{_encoder_core.1} parent=0 // pred_fallthru
    _
  // Predicated region
  $region42: #{_encoder_core.1} parent=0 // pred_check
    _
  $region43: #{_encoder_core.1} parent=0 // pred_check_branch
    %1634 = sbr.rel (0) target = $region45
  $region44: #{_encoder_core.1} parent=0 // pred_region
    _
  $region45: #{_encoder_core.1} parent=0 // pred_fallthru
    _
  // Predicated region
  $region46: #{_encoder_core.1} parent=0 // pred_check
    _
  $region47: #{_encoder_core.1} parent=0 // pred_check_branch
    %1636 = sbr.rel (0) target = $region49
  $region48: #{_encoder_core.1} parent=0 // pred_region
    _
  $region49: #{_encoder_core.1} parent=0 // pred_fallthru
    _
  // Predicated region
  $region50: #{_encoder_core.1} parent=0 // pred_check
    _
  $region51: #{_encoder_core.1} parent=0 // pred_check_branch
    %1638 = sbr.rel (0) target = $region53
  $region52: #{_encoder_core.1} parent=0 // pred_region
    _
  $region53: #{_encoder_core.1} parent=0 // pred_fallthru
    _

</llo_original>
